<compile_context>
chip_gen: v5e
topology: v5e:2x2
jax: 0.10.0
libtpu: 0.0.40
codegen_flags: <defaults>
</compile_context>

<pallas_src>
import functools

import jax
import jax.numpy as jnp
from jax import lax
from jax.experimental import pallas as pl
from jax.experimental.pallas import tpu as pltpu

# LIF / LI parameters (norse defaults except tau_*, per module __init__)
DT = 1e-3
V_TH = 1.0
V_LEAK = 0.0
V_RESET = 0.0


def _round_up(n, m):
    return ((n + m - 1) // m) * m


def _snn_kernel(x_ref, wh_ref, wo_ref, out_ref,
                zs_ref, v1, i1, vo, io,
                *, T, Bp, tau_mem_inv, tau_syn_inv):
    """x_ref: (T*Bp, F); wh_ref: (F, Hf); wo_ref: (Hf, O); out_ref: (T*Bp, O).

    zs_ref: (T*Bp, Hf) scratch. It first holds the hidden pre-activations z_t for every
    timestep, then each LIF step overwrites its own row block with that step's spikes.
    out_ref is similarly reused: it first holds the fc_out pre-activations for every
    timestep, then each LI step overwrites its row block with the output voltage.
    """
    alpha = DT * tau_mem_inv        # membrane integration gain  (dt / tau_mem)
    beta = 1.0 - DT * tau_syn_inv   # synaptic current decay     (1 - dt / tau_syn)

    # ---- 1. Hoisted input projection: one (T*Bp, F) @ (F, Hf) MXU matmul. ----
    zs_ref[...] = jnp.dot(x_ref[...], wh_ref[...], preferred_element_type=jnp.float32)

    # ---- 2. LIF recurrence over time (pure VPU); spikes recorded in place. ----
    v1[...] = jnp.zeros_like(v1)
    i1[...] = jnp.zeros_like(i1)

    def lif_step(t, carry):
        r = pl.multiple_of(t * Bp, Bp)
        z = zs_ref[pl.ds(r, Bp), :]                       # (Bp, Hf) input current jump
        v = v1[...]
        i = i1[...]
        v_dec = v + alpha * ((V_LEAK - v) + i)            # integrate membrane
        i_dec = beta * i                                  # decay synaptic current
        spikes = (v_dec - V_TH > 0.0).astype(jnp.float32)  # Heaviside forward
        zs_ref[pl.ds(r, Bp), :] = spikes                  # record spikes for fc_out
        v1[...] = (1.0 - spikes) * v_dec + spikes * V_RESET
        i1[...] = i_dec + z
        return carry

    lax.fori_loop(0, T, lif_step, 0, unroll=True)

    # ---- 3. Hoisted output projection: (T*Bp, Hf) @ (Hf, O) on all recorded spikes. ----
    out_ref[...] = jnp.dot(zs_ref[...].astype(wo_ref.dtype), wo_ref[...],
                           preferred_element_type=jnp.float32)

    # ---- 4. LI readout filter (norse li_feed_forward_step), in place over out_ref. ----
    vo[...] = jnp.zeros_like(vo)
    io[...] = jnp.zeros_like(io)

    def li_step(t, carry):
        r = pl.multiple_of(t * Bp, Bp)
        i_jump = io[...] + out_ref[pl.ds(r, Bp), :]       # current jump first (norse LI)
        v_new = vo[...] + alpha * ((V_LEAK - vo[...]) + i_jump)
        io[...] = beta * i_jump
        vo[...] = v_new
        out_ref[pl.ds(r, Bp), :] = v_new                  # VMEM store; single HBM DMA at end
        return carry

    lax.fori_loop(0, T, li_step, 0, unroll=True)


def snn_forward(x, w_hidden, w_out, tau_mem, tau_syn, *, matmul_dtype=jnp.float32):
    """x: (T, B, C, H, W) f32; w_hidden: (Hf, F); w_out: (O, Hf) in PyTorch layout.

    matmul_dtype=jnp.bfloat16 routes the two hoisted matmuls onto the bf16 MXU path
    (recommended on v6e/v7x); all neuron state and the spike threshold stay f32.
    """
    T, B = x.shape[0], x.shape[1]
    Hf, F = w_hidden.shape
    O = w_out.shape[0]

    tau_mem_inv = 1.0 / (tau_mem * 0.001)
    tau_syn_inv = 1.0 / (tau_syn * 0.001)

    # Pad batch up to a sublane multiple so per-step row blocks are (8k, lanes) aligned.
    Bp = _round_up(B, 8)
    x_flat = x.reshape(T, B, F).astype(jnp.float32)
    if Bp != B:
        x_flat = jnp.pad(x_flat, ((0, 0), (0, Bp - B), (0, 0)))
    x2d = x_flat.reshape(T * Bp, F).astype(matmul_dtype)

    wh_t = jnp.asarray(w_hidden, jnp.float32).T.astype(matmul_dtype)  # (F, Hf)
    wo_t = jnp.asarray(w_out, jnp.float32).T.astype(matmul_dtype)     # (Hf, O)

    kernel = functools.partial(
        _snn_kernel, T=T, Bp=Bp, tau_mem_inv=tau_mem_inv, tau_syn_inv=tau_syn_inv)

    out2d = pl.pallas_call(
        kernel,
        out_shape=jax.ShapeDtypeStruct((T * Bp, O), jnp.float32),
        scratch_shapes=[
            pltpu.VMEM((T * Bp, Hf), jnp.float32),  # zs: hidden pre-acts, then spikes
            pltpu.VMEM((Bp, Hf), jnp.float32),      # v1 (LIF membrane)
            pltpu.VMEM((Bp, Hf), jnp.float32),      # i1 (LIF synaptic current)
            pltpu.VMEM((Bp, O), jnp.float32),       # vo (LI membrane)
            pltpu.VMEM((Bp, O), jnp.float32),       # io (LI synaptic current)
        ],
    )(x2d, wh_t, wo_t)

    return out2d.reshape(T, Bp, O)[:, :B, :]


def snn_reference(x, w_hidden, w_out, tau_mem, tau_syn):
    """Pure-JAX reference mirroring the PyTorch / norse forward pass (all f32)."""
    T, B = x.shape[0], x.shape[1]
    Hf, F = w_hidden.shape
    O = w_out.shape[0]
    tau_mem_inv = 1.0 / (tau_mem * 0.001)
    tau_syn_inv = 1.0 / (tau_syn * 0.001)
    alpha = DT * tau_mem_inv
    beta = 1.0 - DT * tau_syn_inv
    x_flat = x.reshape(T, B, F)

    def step(carry, xt):
        v1, i1, vo, io = carry
        z = xt @ w_hidden.T
        # LIF (norse lif_feed_forward_step): decay, threshold, reset, then input jump.
        v_dec = v1 + alpha * ((V_LEAK - v1) + i1)
        i_dec = beta * i1
        spikes = (v_dec - V_TH > 0.0).astype(jnp.float32)
        v1 = (1.0 - spikes) * v_dec + spikes * V_RESET
        i1 = i_dec + z
        # fc_out
        z2 = spikes @ w_out.T
        # LI (norse li_feed_forward_step): input jump first, then integrate and decay.
        i_jump = io + z2
        v_new = vo + alpha * ((V_LEAK - vo) + i_jump)
        io = beta * i_jump
        vo = v_new
        return (v1, i1, vo, io), v_new

    init = (jnp.zeros((B, Hf)), jnp.zeros((B, Hf)),
            jnp.zeros((B, O)), jnp.zeros((B, O)))
    _, voltages = lax.scan(step, init, x_flat)
    return voltages


if __name__ == "__main__":
    # Small shapes consistent with the module: x is (seq, batch, C, H, W)
    T, B, C, Hs, Ws = 8, 4, 1, 16, 16
    input_features = C * Hs * Ws          # 256
    hidden_features = 64
    output_features = 8
    tau_mem, tau_syn = 20.0, 10.0         # milliseconds (matches 1/(tau*0.001))

    key = jax.random.PRNGKey(0)
    kx, kh, ko = jax.random.split(key, 3)
    x = jax.random.normal(kx, (T, B, C, Hs, Ws), dtype=jnp.float32)
    # Deterministic Linear weights (PyTorch layout: (out_features, in_features))
    bound_h = 1.0 / (input_features ** 0.5)
    bound_o = 1.0 / (hidden_features ** 0.5)
    w_hidden = jax.random.uniform(kh, (hidden_features, input_features),
                                  minval=-bound_h, maxval=bound_h, dtype=jnp.float32)
    w_out = jax.random.uniform(ko, (output_features, hidden_features),
                               minval=-bound_o, maxval=bound_o, dtype=jnp.float32)

    out = snn_forward(x, w_hidden, w_out, tau_mem, tau_syn)
    out = jax.block_until_ready(out)

    ref = snn_reference(x, w_hidden, w_out, tau_mem, tau_syn)
    assert out.shape == (T, B, output_features)
    assert jnp.allclose(out, ref, atol=1e-5, rtol=1e-5)

    print("KERNEL_OK")
</pallas_src>

<mosaic_0001>
module attributes {stable_mosaic.version = 11 : i64} {
  func.func @_snn_kernel(%arg0: memref<64x256xf32, #tpu.memory_space<vmem>>, %arg1: memref<256x64xf32, #tpu.memory_space<vmem>>, %arg2: memref<64x8xf32, #tpu.memory_space<vmem>>, %arg3: memref<64x8xf32, #tpu.memory_space<vmem>>, %arg4: memref<64x64xf32, #tpu.memory_space<vmem>>, %arg5: memref<8x64xf32, #tpu.memory_space<vmem>>, %arg6: memref<8x64xf32, #tpu.memory_space<vmem>>, %arg7: memref<8x8xf32, #tpu.memory_space<vmem>>, %arg8: memref<8x8xf32, #tpu.memory_space<vmem>>) attributes {dimension_semantics = [], scalar_prefetch = 0 : i64, scratch_operands = 5 : i64, tpu.core_type = #tpu.core_type<tc>} {
    %c0 = arith.constant 0 : index
    %c0_0 = arith.constant 0 : index
    %0 = vector.load %arg0[%c0, %c0_0] : memref<64x256xf32, #tpu.memory_space<vmem>>, vector<64x256xf32>
    %c0_1 = arith.constant 0 : index
    %c0_2 = arith.constant 0 : index
    %1 = vector.load %arg1[%c0_1, %c0_2] : memref<256x64xf32, #tpu.memory_space<vmem>>, vector<256x64xf32>
    %cst = arith.constant dense<0.000000e+00> : vector<64x64xf32>
    %2 = tpu.matmul %0, %1, %cst {dimension_numbers = #tpu.dot_dimension_numbers<[1], [0], [0], [1], [0, 0, 1, 1], [], []>} : vector<64x256xf32>, vector<256x64xf32>, vector<64x64xf32> -> vector<64x64xf32>
    %c0_3 = arith.constant 0 : index
    %c0_4 = arith.constant 0 : index
    %3 = vector.load %arg4[%c0_3, %c0_4] : memref<64x64xf32, #tpu.memory_space<vmem>>, vector<64x64xf32>
    tpu.vector_store %arg4[%c0_3, %c0_4], %2 {strides = array<i32>} : memref<64x64xf32, #tpu.memory_space<vmem>>, vector<64x64xf32>,
    %cst_5 = arith.constant 0.000000e+00 : f32
    %4 = vector.broadcast %cst_5 : f32 to vector<8x64xf32>
    %c0_6 = arith.constant 0 : index
    %c0_7 = arith.constant 0 : index
    %5 = vector.load %arg5[%c0_6, %c0_7] : memref<8x64xf32, #tpu.memory_space<vmem>>, vector<8x64xf32>
    tpu.vector_store %arg5[%c0_6, %c0_7], %4 {strides = array<i32>} : memref<8x64xf32, #tpu.memory_space<vmem>>, vector<8x64xf32>,
    %cst_8 = arith.constant 0.000000e+00 : f32
    %6 = vector.broadcast %cst_8 : f32 to vector<8x64xf32>
    %c0_9 = arith.constant 0 : index
    %c0_10 = arith.constant 0 : index
    %7 = vector.load %arg6[%c0_9, %c0_10] : memref<8x64xf32, #tpu.memory_space<vmem>>, vector<8x64xf32>
    tpu.vector_store %arg6[%c0_9, %c0_10], %6 {strides = array<i32>} : memref<8x64xf32, #tpu.memory_space<vmem>>, vector<8x64xf32>,
    %c0_i32 = arith.constant 0 : i32
    %c8_i32 = arith.constant 8 : i32
    %8 = arith.muli %c0_i32, %c8_i32 : i32
    %9 = tpu.assume_multiple %8, 8 : i32
    %10 = arith.index_cast %9 : i32 to index
    %c0_11 = arith.constant 0 : index
    %11 = vector.load %arg4[%10, %c0_11] : memref<64x64xf32, #tpu.memory_space<vmem>>, vector<8x64xf32>
    %c0_12 = arith.constant 0 : index
    %c0_13 = arith.constant 0 : index
    %12 = vector.load %arg5[%c0_12, %c0_13] : memref<8x64xf32, #tpu.memory_space<vmem>>, vector<8x64xf32>
    %c0_14 = arith.constant 0 : index
    %c0_15 = arith.constant 0 : index
    %13 = vector.load %arg6[%c0_14, %c0_15] : memref<8x64xf32, #tpu.memory_space<vmem>>, vector<8x64xf32>
    %cst_16 = arith.constant 0.000000e+00 : f32
    %14 = vector.broadcast %cst_16 : f32 to vector<8x64xf32>
    %15 = arith.subf %14, %12 : vector<8x64xf32>
    %16 = arith.addf %15, %13 : vector<8x64xf32>
    %cst_17 = arith.constant 5.000000e-02 : f32
    %17 = vector.broadcast %cst_17 : f32 to vector<8x64xf32>
    %18 = arith.mulf %17, %16 : vector<8x64xf32>
    %19 = arith.addf %12, %18 : vector<8x64xf32>
    %cst_18 = arith.constant 0.899999976 : f32
    %20 = vector.broadcast %cst_18 : f32 to vector<8x64xf32>
    %21 = arith.mulf %20, %13 : vector<8x64xf32>
    %cst_19 = arith.constant 1.000000e+00 : f32
    %22 = vector.broadcast %cst_19 : f32 to vector<8x64xf32>
    %23 = arith.subf %19, %22 : vector<8x64xf32>
    %cst_20 = arith.constant 0.000000e+00 : f32
    %24 = vector.broadcast %cst_20 : f32 to vector<8x64xf32>
    %25 = arith.cmpf ogt, %23, %24 : vector<8x64xf32>
    %26 = arith.extui %25 : vector<8x64xi1> to vector<8x64xi32>
    %27 = arith.sitofp %26 : vector<8x64xi32> to vector<8x64xf32>
    %28 = arith.index_cast %9 : i32 to index
    %c0_21 = arith.constant 0 : index
    %29 = vector.load %arg4[%28, %c0_21] : memref<64x64xf32, #tpu.memory_space<vmem>>, vector<8x64xf32>
    tpu.vector_store %arg4[%28, %c0_21], %27 {strides = array<i32>} : memref<64x64xf32, #tpu.memory_space<vmem>>, vector<8x64xf32>,
    %cst_22 = arith.constant 1.000000e+00 : f32
    %30 = vector.broadcast %cst_22 : f32 to vector<8x64xf32>
    %31 = arith.subf %30, %27 : vector<8x64xf32>
    %32 = arith.mulf %31, %19 : vector<8x64xf32>
    %cst_23 = arith.constant 0.000000e+00 : f32
    %33 = vector.broadcast %cst_23 : f32 to vector<8x64xf32>
    %34 = arith.mulf %27, %33 : vector<8x64xf32>
    %35 = arith.addf %32, %34 : vector<8x64xf32>
    %c0_24 = arith.constant 0 : index
    %c0_25 = arith.constant 0 : index
    %36 = vector.load %arg5[%c0_24, %c0_25] : memref<8x64xf32, #tpu.memory_space<vmem>>, vector<8x64xf32>
    tpu.vector_store %arg5[%c0_24, %c0_25], %35 {strides = array<i32>} : memref<8x64xf32, #tpu.memory_space<vmem>>, vector<8x64xf32>,
    %37 = arith.addf %21, %11 : vector<8x64xf32>
    %c0_26 = arith.constant 0 : index
    %c0_27 = arith.constant 0 : index
    %38 = vector.load %arg6[%c0_26, %c0_27] : memref<8x64xf32, #tpu.memory_space<vmem>>, vector<8x64xf32>
    tpu.vector_store %arg6[%c0_26, %c0_27], %37 {strides = array<i32>} : memref<8x64xf32, #tpu.memory_space<vmem>>, vector<8x64xf32>,
    %c1_i32 = arith.constant 1 : i32
    %c8_i32_28 = arith.constant 8 : i32
    %39 = arith.muli %c1_i32, %c8_i32_28 : i32
    %40 = tpu.assume_multiple %39, 8 : i32
    %41 = arith.index_cast %40 : i32 to index
    %c0_29 = arith.constant 0 : index
    %42 = vector.load %arg4[%41, %c0_29] : memref<64x64xf32, #tpu.memory_space<vmem>>, vector<8x64xf32>
    %c0_30 = arith.constant 0 : index
    %c0_31 = arith.constant 0 : index
    %43 = vector.load %arg5[%c0_30, %c0_31] : memref<8x64xf32, #tpu.memory_space<vmem>>, vector<8x64xf32>
    %c0_32 = arith.constant 0 : index
    %c0_33 = arith.constant 0 : index
    %44 = vector.load %arg6[%c0_32, %c0_33] : memref<8x64xf32, #tpu.memory_space<vmem>>, vector<8x64xf32>
    %cst_34 = arith.constant 0.000000e+00 : f32
    %45 = vector.broadcast %cst_34 : f32 to vector<8x64xf32>
    %46 = arith.subf %45, %43 : vector<8x64xf32>
    %47 = arith.addf %46, %44 : vector<8x64xf32>
    %cst_35 = arith.constant 5.000000e-02 : f32
    %48 = vector.broadcast %cst_35 : f32 to vector<8x64xf32>
    %49 = arith.mulf %48, %47 : vector<8x64xf32>
    %50 = arith.addf %43, %49 : vector<8x64xf32>
    %cst_36 = arith.constant 0.899999976 : f32
    %51 = vector.broadcast %cst_36 : f32 to vector<8x64xf32>
    %52 = arith.mulf %51, %44 : vector<8x64xf32>
    %cst_37 = arith.constant 1.000000e+00 : f32
    %53 = vector.broadcast %cst_37 : f32 to vector<8x64xf32>
    %54 = arith.subf %50, %53 : vector<8x64xf32>
    %cst_38 = arith.constant 0.000000e+00 : f32
    %55 = vector.broadcast %cst_38 : f32 to vector<8x64xf32>
    %56 = arith.cmpf ogt, %54, %55 : vector<8x64xf32>
    %57 = arith.extui %56 : vector<8x64xi1> to vector<8x64xi32>
    %58 = arith.sitofp %57 : vector<8x64xi32> to vector<8x64xf32>
    %59 = arith.index_cast %40 : i32 to index
    %c0_39 = arith.constant 0 : index
    %60 = vector.load %arg4[%59, %c0_39] : memref<64x64xf32, #tpu.memory_space<vmem>>, vector<8x64xf32>
    tpu.vector_store %arg4[%59, %c0_39], %58 {strides = array<i32>} : memref<64x64xf32, #tpu.memory_space<vmem>>, vector<8x64xf32>,
    %cst_40 = arith.constant 1.000000e+00 : f32
    %61 = vector.broadcast %cst_40 : f32 to vector<8x64xf32>
    %62 = arith.subf %61, %58 : vector<8x64xf32>
    %63 = arith.mulf %62, %50 : vector<8x64xf32>
    %cst_41 = arith.constant 0.000000e+00 : f32
    %64 = vector.broadcast %cst_41 : f32 to vector<8x64xf32>
    %65 = arith.mulf %58, %64 : vector<8x64xf32>
    %66 = arith.addf %63, %65 : vector<8x64xf32>
    %c0_42 = arith.constant 0 : index
    %c0_43 = arith.constant 0 : index
    %67 = vector.load %arg5[%c0_42, %c0_43] : memref<8x64xf32, #tpu.memory_space<vmem>>, vector<8x64xf32>
    tpu.vector_store %arg5[%c0_42, %c0_43], %66 {strides = array<i32>} : memref<8x64xf32, #tpu.memory_space<vmem>>, vector<8x64xf32>,
    %68 = arith.addf %52, %42 : vector<8x64xf32>
    %c0_44 = arith.constant 0 : index
    %c0_45 = arith.constant 0 : index
    %69 = vector.load %arg6[%c0_44, %c0_45] : memref<8x64xf32, #tpu.memory_space<vmem>>, vector<8x64xf32>
    tpu.vector_store %arg6[%c0_44, %c0_45], %68 {strides = array<i32>} : memref<8x64xf32, #tpu.memory_space<vmem>>, vector<8x64xf32>,
    %c2_i32 = arith.constant 2 : i32
    %c8_i32_46 = arith.constant 8 : i32
    %70 = arith.muli %c2_i32, %c8_i32_46 : i32
    %71 = tpu.assume_multiple %70, 8 : i32
    %72 = arith.index_cast %71 : i32 to index
    %c0_47 = arith.constant 0 : index
    %73 = vector.load %arg4[%72, %c0_47] : memref<64x64xf32, #tpu.memory_space<vmem>>, vector<8x64xf32>
    %c0_48 = arith.constant 0 : index
    %c0_49 = arith.constant 0 : index
    %74 = vector.load %arg5[%c0_48, %c0_49] : memref<8x64xf32, #tpu.memory_space<vmem>>, vector<8x64xf32>
    %c0_50 = arith.constant 0 : index
    %c0_51 = arith.constant 0 : index
    %75 = vector.load %arg6[%c0_50, %c0_51] : memref<8x64xf32, #tpu.memory_space<vmem>>, vector<8x64xf32>
    %cst_52 = arith.constant 0.000000e+00 : f32
    %76 = vector.broadcast %cst_52 : f32 to vector<8x64xf32>
    %77 = arith.subf %76, %74 : vector<8x64xf32>
    %78 = arith.addf %77, %75 : vector<8x64xf32>
    %cst_53 = arith.constant 5.000000e-02 : f32
    %79 = vector.broadcast %cst_53 : f32 to vector<8x64xf32>
    %80 = arith.mulf %79, %78 : vector<8x64xf32>
    %81 = arith.addf %74, %80 : vector<8x64xf32>
    %cst_54 = arith.constant 0.899999976 : f32
    %82 = vector.broadcast %cst_54 : f32 to vector<8x64xf32>
    %83 = arith.mulf %82, %75 : vector<8x64xf32>
    %cst_55 = arith.constant 1.000000e+00 : f32
    %84 = vector.broadcast %cst_55 : f32 to vector<8x64xf32>
    %85 = arith.subf %81, %84 : vector<8x64xf32>
    %cst_56 = arith.constant 0.000000e+00 : f32
    %86 = vector.broadcast %cst_56 : f32 to vector<8x64xf32>
    %87 = arith.cmpf ogt, %85, %86 : vector<8x64xf32>
    %88 = arith.extui %87 : vector<8x64xi1> to vector<8x64xi32>
    %89 = arith.sitofp %88 : vector<8x64xi32> to vector<8x64xf32>
    %90 = arith.index_cast %71 : i32 to index
    %c0_57 = arith.constant 0 : index
    %91 = vector.load %arg4[%90, %c0_57] : memref<64x64xf32, #tpu.memory_space<vmem>>, vector<8x64xf32>
    tpu.vector_store %arg4[%90, %c0_57], %89 {strides = array<i32>} : memref<64x64xf32, #tpu.memory_space<vmem>>, vector<8x64xf32>,
    %cst_58 = arith.constant 1.000000e+00 : f32
    %92 = vector.broadcast %cst_58 : f32 to vector<8x64xf32>
    %93 = arith.subf %92, %89 : vector<8x64xf32>
    %94 = arith.mulf %93, %81 : vector<8x64xf32>
    %cst_59 = arith.constant 0.000000e+00 : f32
    %95 = vector.broadcast %cst_59 : f32 to vector<8x64xf32>
    %96 = arith.mulf %89, %95 : vector<8x64xf32>
    %97 = arith.addf %94, %96 : vector<8x64xf32>
    %c0_60 = arith.constant 0 : index
    %c0_61 = arith.constant 0 : index
    %98 = vector.load %arg5[%c0_60, %c0_61] : memref<8x64xf32, #tpu.memory_space<vmem>>, vector<8x64xf32>
    tpu.vector_store %arg5[%c0_60, %c0_61], %97 {strides = array<i32>} : memref<8x64xf32, #tpu.memory_space<vmem>>, vector<8x64xf32>,
    %99 = arith.addf %83, %73 : vector<8x64xf32>
    %c0_62 = arith.constant 0 : index
    %c0_63 = arith.constant 0 : index
    %100 = vector.load %arg6[%c0_62, %c0_63] : memref<8x64xf32, #tpu.memory_space<vmem>>, vector<8x64xf32>
    tpu.vector_store %arg6[%c0_62, %c0_63], %99 {strides = array<i32>} : memref<8x64xf32, #tpu.memory_space<vmem>>, vector<8x64xf32>,
    %c3_i32 = arith.constant 3 : i32
    %c8_i32_64 = arith.constant 8 : i32
    %101 = arith.muli %c3_i32, %c8_i32_64 : i32
    %102 = tpu.assume_multiple %101, 8 : i32
    %103 = arith.index_cast %102 : i32 to index
    %c0_65 = arith.constant 0 : index
    %104 = vector.load %arg4[%103, %c0_65] : memref<64x64xf32, #tpu.memory_space<vmem>>, vector<8x64xf32>
    %c0_66 = arith.constant 0 : index
    %c0_67 = arith.constant 0 : index
    %105 = vector.load %arg5[%c0_66, %c0_67] : memref<8x64xf32, #tpu.memory_space<vmem>>, vector<8x64xf32>
    %c0_68 = arith.constant 0 : index
    %c0_69 = arith.constant 0 : index
    %106 = vector.load %arg6[%c0_68, %c0_69] : memref<8x64xf32, #tpu.memory_space<vmem>>, vector<8x64xf32>
    %cst_70 = arith.constant 0.000000e+00 : f32
    %107 = vector.broadcast %cst_70 : f32 to vector<8x64xf32>
    %108 = arith.subf %107, %105 : vector<8x64xf32>
    %109 = arith.addf %108, %106 : vector<8x64xf32>
    %cst_71 = arith.constant 5.000000e-02 : f32
    %110 = vector.broadcast %cst_71 : f32 to vector<8x64xf32>
    %111 = arith.mulf %110, %109 : vector<8x64xf32>
    %112 = arith.addf %105, %111 : vector<8x64xf32>
    %cst_72 = arith.constant 0.899999976 : f32
    %113 = vector.broadcast %cst_72 : f32 to vector<8x64xf32>
    %114 = arith.mulf %113, %106 : vector<8x64xf32>
    %cst_73 = arith.constant 1.000000e+00 : f32
    %115 = vector.broadcast %cst_73 : f32 to vector<8x64xf32>
    %116 = arith.subf %112, %115 : vector<8x64xf32>
    %cst_74 = arith.constant 0.000000e+00 : f32
    %117 = vector.broadcast %cst_74 : f32 to vector<8x64xf32>
    %118 = arith.cmpf ogt, %116, %117 : vector<8x64xf32>
    %119 = arith.extui %118 : vector<8x64xi1> to vector<8x64xi32>
    %120 = arith.sitofp %119 : vector<8x64xi32> to vector<8x64xf32>
    %121 = arith.index_cast %102 : i32 to index
    %c0_75 = arith.constant 0 : index
    %122 = vector.load %arg4[%121, %c0_75] : memref<64x64xf32, #tpu.memory_space<vmem>>, vector<8x64xf32>
    tpu.vector_store %arg4[%121, %c0_75], %120 {strides = array<i32>} : memref<64x64xf32, #tpu.memory_space<vmem>>, vector<8x64xf32>,
    %cst_76 = arith.constant 1.000000e+00 : f32
    %123 = vector.broadcast %cst_76 : f32 to vector<8x64xf32>
    %124 = arith.subf %123, %120 : vector<8x64xf32>
    %125 = arith.mulf %124, %112 : vector<8x64xf32>
    %cst_77 = arith.constant 0.000000e+00 : f32
    %126 = vector.broadcast %cst_77 : f32 to vector<8x64xf32>
    %127 = arith.mulf %120, %126 : vector<8x64xf32>
    %128 = arith.addf %125, %127 : vector<8x64xf32>
    %c0_78 = arith.constant 0 : index
    %c0_79 = arith.constant 0 : index
    %129 = vector.load %arg5[%c0_78, %c0_79] : memref<8x64xf32, #tpu.memory_space<vmem>>, vector<8x64xf32>
    tpu.vector_store %arg5[%c0_78, %c0_79], %128 {strides = array<i32>} : memref<8x64xf32, #tpu.memory_space<vmem>>, vector<8x64xf32>,
    %130 = arith.addf %114, %104 : vector<8x64xf32>
    %c0_80 = arith.constant 0 : index
    %c0_81 = arith.constant 0 : index
    %131 = vector.load %arg6[%c0_80, %c0_81] : memref<8x64xf32, #tpu.memory_space<vmem>>, vector<8x64xf32>
    tpu.vector_store %arg6[%c0_80, %c0_81], %130 {strides = array<i32>} : memref<8x64xf32, #tpu.memory_space<vmem>>, vector<8x64xf32>,
    %c4_i32 = arith.constant 4 : i32
    %c8_i32_82 = arith.constant 8 : i32
    %132 = arith.muli %c4_i32, %c8_i32_82 : i32
    %133 = tpu.assume_multiple %132, 8 : i32
    %134 = arith.index_cast %133 : i32 to index
    %c0_83 = arith.constant 0 : index
    %135 = vector.load %arg4[%134, %c0_83] : memref<64x64xf32, #tpu.memory_space<vmem>>, vector<8x64xf32>
    %c0_84 = arith.constant 0 : index
    %c0_85 = arith.constant 0 : index
    %136 = vector.load %arg5[%c0_84, %c0_85] : memref<8x64xf32, #tpu.memory_space<vmem>>, vector<8x64xf32>
    %c0_86 = arith.constant 0 : index
    %c0_87 = arith.constant 0 : index
    %137 = vector.load %arg6[%c0_86, %c0_87] : memref<8x64xf32, #tpu.memory_space<vmem>>, vector<8x64xf32>
    %cst_88 = arith.constant 0.000000e+00 : f32
    %138 = vector.broadcast %cst_88 : f32 to vector<8x64xf32>
    %139 = arith.subf %138, %136 : vector<8x64xf32>
    %140 = arith.addf %139, %137 : vector<8x64xf32>
    %cst_89 = arith.constant 5.000000e-02 : f32
    %141 = vector.broadcast %cst_89 : f32 to vector<8x64xf32>
    %142 = arith.mulf %141, %140 : vector<8x64xf32>
    %143 = arith.addf %136, %142 : vector<8x64xf32>
    %cst_90 = arith.constant 0.899999976 : f32
    %144 = vector.broadcast %cst_90 : f32 to vector<8x64xf32>
    %145 = arith.mulf %144, %137 : vector<8x64xf32>
    %cst_91 = arith.constant 1.000000e+00 : f32
    %146 = vector.broadcast %cst_91 : f32 to vector<8x64xf32>
    %147 = arith.subf %143, %146 : vector<8x64xf32>
    %cst_92 = arith.constant 0.000000e+00 : f32
    %148 = vector.broadcast %cst_92 : f32 to vector<8x64xf32>
    %149 = arith.cmpf ogt, %147, %148 : vector<8x64xf32>
    %150 = arith.extui %149 : vector<8x64xi1> to vector<8x64xi32>
    %151 = arith.sitofp %150 : vector<8x64xi32> to vector<8x64xf32>
    %152 = arith.index_cast %133 : i32 to index
    %c0_93 = arith.constant 0 : index
    %153 = vector.load %arg4[%152, %c0_93] : memref<64x64xf32, #tpu.memory_space<vmem>>, vector<8x64xf32>
    tpu.vector_store %arg4[%152, %c0_93], %151 {strides = array<i32>} : memref<64x64xf32, #tpu.memory_space<vmem>>, vector<8x64xf32>,
    %cst_94 = arith.constant 1.000000e+00 : f32
    %154 = vector.broadcast %cst_94 : f32 to vector<8x64xf32>
    %155 = arith.subf %154, %151 : vector<8x64xf32>
    %156 = arith.mulf %155, %143 : vector<8x64xf32>
    %cst_95 = arith.constant 0.000000e+00 : f32
    %157 = vector.broadcast %cst_95 : f32 to vector<8x64xf32>
    %158 = arith.mulf %151, %157 : vector<8x64xf32>
    %159 = arith.addf %156, %158 : vector<8x64xf32>
    %c0_96 = arith.constant 0 : index
    %c0_97 = arith.constant 0 : index
    %160 = vector.load %arg5[%c0_96, %c0_97] : memref<8x64xf32, #tpu.memory_space<vmem>>, vector<8x64xf32>
    tpu.vector_store %arg5[%c0_96, %c0_97], %159 {strides = array<i32>} : memref<8x64xf32, #tpu.memory_space<vmem>>, vector<8x64xf32>,
    %161 = arith.addf %145, %135 : vector<8x64xf32>
    %c0_98 = arith.constant 0 : index
    %c0_99 = arith.constant 0 : index
    %162 = vector.load %arg6[%c0_98, %c0_99] : memref<8x64xf32, #tpu.memory_space<vmem>>, vector<8x64xf32>
    tpu.vector_store %arg6[%c0_98, %c0_99], %161 {strides = array<i32>} : memref<8x64xf32, #tpu.memory_space<vmem>>, vector<8x64xf32>,
    %c5_i32 = arith.constant 5 : i32
    %c8_i32_100 = arith.constant 8 : i32
    %163 = arith.muli %c5_i32, %c8_i32_100 : i32
    %164 = tpu.assume_multiple %163, 8 : i32
    %165 = arith.index_cast %164 : i32 to index
    %c0_101 = arith.constant 0 : index
    %166 = vector.load %arg4[%165, %c0_101] : memref<64x64xf32, #tpu.memory_space<vmem>>, vector<8x64xf32>
    %c0_102 = arith.constant 0 : index
    %c0_103 = arith.constant 0 : index
    %167 = vector.load %arg5[%c0_102, %c0_103] : memref<8x64xf32, #tpu.memory_space<vmem>>, vector<8x64xf32>
    %c0_104 = arith.constant 0 : index
    %c0_105 = arith.constant 0 : index
    %168 = vector.load %arg6[%c0_104, %c0_105] : memref<8x64xf32, #tpu.memory_space<vmem>>, vector<8x64xf32>
    %cst_106 = arith.constant 0.000000e+00 : f32
    %169 = vector.broadcast %cst_106 : f32 to vector<8x64xf32>
    %170 = arith.subf %169, %167 : vector<8x64xf32>
    %171 = arith.addf %170, %168 : vector<8x64xf32>
    %cst_107 = arith.constant 5.000000e-02 : f32
    %172 = vector.broadcast %cst_107 : f32 to vector<8x64xf32>
    %173 = arith.mulf %172, %171 : vector<8x64xf32>
    %174 = arith.addf %167, %173 : vector<8x64xf32>
    %cst_108 = arith.constant 0.899999976 : f32
    %175 = vector.broadcast %cst_108 : f32 to vector<8x64xf32>
    %176 = arith.mulf %175, %168 : vector<8x64xf32>
    %cst_109 = arith.constant 1.000000e+00 : f32
    %177 = vector.broadcast %cst_109 : f32 to vector<8x64xf32>
    %178 = arith.subf %174, %177 : vector<8x64xf32>
    %cst_110 = arith.constant 0.000000e+00 : f32
    %179 = vector.broadcast %cst_110 : f32 to vector<8x64xf32>
    %180 = arith.cmpf ogt, %178, %179 : vector<8x64xf32>
    %181 = arith.extui %180 : vector<8x64xi1> to vector<8x64xi32>
    %182 = arith.sitofp %181 : vector<8x64xi32> to vector<8x64xf32>
    %183 = arith.index_cast %164 : i32 to index
    %c0_111 = arith.constant 0 : index
    %184 = vector.load %arg4[%183, %c0_111] : memref<64x64xf32, #tpu.memory_space<vmem>>, vector<8x64xf32>
    tpu.vector_store %arg4[%183, %c0_111], %182 {strides = array<i32>} : memref<64x64xf32, #tpu.memory_space<vmem>>, vector<8x64xf32>,
    %cst_112 = arith.constant 1.000000e+00 : f32
    %185 = vector.broadcast %cst_112 : f32 to vector<8x64xf32>
    %186 = arith.subf %185, %182 : vector<8x64xf32>
    %187 = arith.mulf %186, %174 : vector<8x64xf32>
    %cst_113 = arith.constant 0.000000e+00 : f32
    %188 = vector.broadcast %cst_113 : f32 to vector<8x64xf32>
    %189 = arith.mulf %182, %188 : vector<8x64xf32>
    %190 = arith.addf %187, %189 : vector<8x64xf32>
    %c0_114 = arith.constant 0 : index
    %c0_115 = arith.constant 0 : index
    %191 = vector.load %arg5[%c0_114, %c0_115] : memref<8x64xf32, #tpu.memory_space<vmem>>, vector<8x64xf32>
    tpu.vector_store %arg5[%c0_114, %c0_115], %190 {strides = array<i32>} : memref<8x64xf32, #tpu.memory_space<vmem>>, vector<8x64xf32>,
    %192 = arith.addf %176, %166 : vector<8x64xf32>
    %c0_116 = arith.constant 0 : index
    %c0_117 = arith.constant 0 : index
    %193 = vector.load %arg6[%c0_116, %c0_117] : memref<8x64xf32, #tpu.memory_space<vmem>>, vector<8x64xf32>
    tpu.vector_store %arg6[%c0_116, %c0_117], %192 {strides = array<i32>} : memref<8x64xf32, #tpu.memory_space<vmem>>, vector<8x64xf32>,
    %c6_i32 = arith.constant 6 : i32
    %c8_i32_118 = arith.constant 8 : i32
    %194 = arith.muli %c6_i32, %c8_i32_118 : i32
    %195 = tpu.assume_multiple %194, 8 : i32
    %196 = arith.index_cast %195 : i32 to index
    %c0_119 = arith.constant 0 : index
    %197 = vector.load %arg4[%196, %c0_119] : memref<64x64xf32, #tpu.memory_space<vmem>>, vector<8x64xf32>
    %c0_120 = arith.constant 0 : index
    %c0_121 = arith.constant 0 : index
    %198 = vector.load %arg5[%c0_120, %c0_121] : memref<8x64xf32, #tpu.memory_space<vmem>>, vector<8x64xf32>
    %c0_122 = arith.constant 0 : index
    %c0_123 = arith.constant 0 : index
    %199 = vector.load %arg6[%c0_122, %c0_123] : memref<8x64xf32, #tpu.memory_space<vmem>>, vector<8x64xf32>
    %cst_124 = arith.constant 0.000000e+00 : f32
    %200 = vector.broadcast %cst_124 : f32 to vector<8x64xf32>
    %201 = arith.subf %200, %198 : vector<8x64xf32>
    %202 = arith.addf %201, %199 : vector<8x64xf32>
    %cst_125 = arith.constant 5.000000e-02 : f32
    %203 = vector.broadcast %cst_125 : f32 to vector<8x64xf32>
    %204 = arith.mulf %203, %202 : vector<8x64xf32>
    %205 = arith.addf %198, %204 : vector<8x64xf32>
    %cst_126 = arith.constant 0.899999976 : f32
    %206 = vector.broadcast %cst_126 : f32 to vector<8x64xf32>
    %207 = arith.mulf %206, %199 : vector<8x64xf32>
    %cst_127 = arith.constant 1.000000e+00 : f32
    %208 = vector.broadcast %cst_127 : f32 to vector<8x64xf32>
    %209 = arith.subf %205, %208 : vector<8x64xf32>
    %cst_128 = arith.constant 0.000000e+00 : f32
    %210 = vector.broadcast %cst_128 : f32 to vector<8x64xf32>
    %211 = arith.cmpf ogt, %209, %210 : vector<8x64xf32>
    %212 = arith.extui %211 : vector<8x64xi1> to vector<8x64xi32>
    %213 = arith.sitofp %212 : vector<8x64xi32> to vector<8x64xf32>
    %214 = arith.index_cast %195 : i32 to index
    %c0_129 = arith.constant 0 : index
    %215 = vector.load %arg4[%214, %c0_129] : memref<64x64xf32, #tpu.memory_space<vmem>>, vector<8x64xf32>
    tpu.vector_store %arg4[%214, %c0_129], %213 {strides = array<i32>} : memref<64x64xf32, #tpu.memory_space<vmem>>, vector<8x64xf32>,
    %cst_130 = arith.constant 1.000000e+00 : f32
    %216 = vector.broadcast %cst_130 : f32 to vector<8x64xf32>
    %217 = arith.subf %216, %213 : vector<8x64xf32>
    %218 = arith.mulf %217, %205 : vector<8x64xf32>
    %cst_131 = arith.constant 0.000000e+00 : f32
    %219 = vector.broadcast %cst_131 : f32 to vector<8x64xf32>
    %220 = arith.mulf %213, %219 : vector<8x64xf32>
    %221 = arith.addf %218, %220 : vector<8x64xf32>
    %c0_132 = arith.constant 0 : index
    %c0_133 = arith.constant 0 : index
    %222 = vector.load %arg5[%c0_132, %c0_133] : memref<8x64xf32, #tpu.memory_space<vmem>>, vector<8x64xf32>
    tpu.vector_store %arg5[%c0_132, %c0_133], %221 {strides = array<i32>} : memref<8x64xf32, #tpu.memory_space<vmem>>, vector<8x64xf32>,
    %223 = arith.addf %207, %197 : vector<8x64xf32>
    %c0_134 = arith.constant 0 : index
    %c0_135 = arith.constant 0 : index
    %224 = vector.load %arg6[%c0_134, %c0_135] : memref<8x64xf32, #tpu.memory_space<vmem>>, vector<8x64xf32>
    tpu.vector_store %arg6[%c0_134, %c0_135], %223 {strides = array<i32>} : memref<8x64xf32, #tpu.memory_space<vmem>>, vector<8x64xf32>,
    %c7_i32 = arith.constant 7 : i32
    %c8_i32_136 = arith.constant 8 : i32
    %225 = arith.muli %c7_i32, %c8_i32_136 : i32
    %226 = tpu.assume_multiple %225, 8 : i32
    %227 = arith.index_cast %226 : i32 to index
    %c0_137 = arith.constant 0 : index
    %228 = vector.load %arg4[%227, %c0_137] : memref<64x64xf32, #tpu.memory_space<vmem>>, vector<8x64xf32>
    %c0_138 = arith.constant 0 : index
    %c0_139 = arith.constant 0 : index
    %229 = vector.load %arg5[%c0_138, %c0_139] : memref<8x64xf32, #tpu.memory_space<vmem>>, vector<8x64xf32>
    %c0_140 = arith.constant 0 : index
    %c0_141 = arith.constant 0 : index
    %230 = vector.load %arg6[%c0_140, %c0_141] : memref<8x64xf32, #tpu.memory_space<vmem>>, vector<8x64xf32>
    %cst_142 = arith.constant 0.000000e+00 : f32
    %231 = vector.broadcast %cst_142 : f32 to vector<8x64xf32>
    %232 = arith.subf %231, %229 : vector<8x64xf32>
    %233 = arith.addf %232, %230 : vector<8x64xf32>
    %cst_143 = arith.constant 5.000000e-02 : f32
    %234 = vector.broadcast %cst_143 : f32 to vector<8x64xf32>
    %235 = arith.mulf %234, %233 : vector<8x64xf32>
    %236 = arith.addf %229, %235 : vector<8x64xf32>
    %cst_144 = arith.constant 0.899999976 : f32
    %237 = vector.broadcast %cst_144 : f32 to vector<8x64xf32>
    %238 = arith.mulf %237, %230 : vector<8x64xf32>
    %cst_145 = arith.constant 1.000000e+00 : f32
    %239 = vector.broadcast %cst_145 : f32 to vector<8x64xf32>
    %240 = arith.subf %236, %239 : vector<8x64xf32>
    %cst_146 = arith.constant 0.000000e+00 : f32
    %241 = vector.broadcast %cst_146 : f32 to vector<8x64xf32>
    %242 = arith.cmpf ogt, %240, %241 : vector<8x64xf32>
    %243 = arith.extui %242 : vector<8x64xi1> to vector<8x64xi32>
    %244 = arith.sitofp %243 : vector<8x64xi32> to vector<8x64xf32>
    %245 = arith.index_cast %226 : i32 to index
    %c0_147 = arith.constant 0 : index
    %246 = vector.load %arg4[%245, %c0_147] : memref<64x64xf32, #tpu.memory_space<vmem>>, vector<8x64xf32>
    tpu.vector_store %arg4[%245, %c0_147], %244 {strides = array<i32>} : memref<64x64xf32, #tpu.memory_space<vmem>>, vector<8x64xf32>,
    %cst_148 = arith.constant 1.000000e+00 : f32
    %247 = vector.broadcast %cst_148 : f32 to vector<8x64xf32>
    %248 = arith.subf %247, %244 : vector<8x64xf32>
    %249 = arith.mulf %248, %236 : vector<8x64xf32>
    %cst_149 = arith.constant 0.000000e+00 : f32
    %250 = vector.broadcast %cst_149 : f32 to vector<8x64xf32>
    %251 = arith.mulf %244, %250 : vector<8x64xf32>
    %252 = arith.addf %249, %251 : vector<8x64xf32>
    %c0_150 = arith.constant 0 : index
    %c0_151 = arith.constant 0 : index
    %253 = vector.load %arg5[%c0_150, %c0_151] : memref<8x64xf32, #tpu.memory_space<vmem>>, vector<8x64xf32>
    tpu.vector_store %arg5[%c0_150, %c0_151], %252 {strides = array<i32>} : memref<8x64xf32, #tpu.memory_space<vmem>>, vector<8x64xf32>,
    %254 = arith.addf %238, %228 : vector<8x64xf32>
    %c0_152 = arith.constant 0 : index
    %c0_153 = arith.constant 0 : index
    %255 = vector.load %arg6[%c0_152, %c0_153] : memref<8x64xf32, #tpu.memory_space<vmem>>, vector<8x64xf32>
    tpu.vector_store %arg6[%c0_152, %c0_153], %254 {strides = array<i32>} : memref<8x64xf32, #tpu.memory_space<vmem>>, vector<8x64xf32>,
    %c8_i32_154 = arith.constant 8 : i32
    %c0_155 = arith.constant 0 : index
    %c0_156 = arith.constant 0 : index
    %256 = vector.load %arg4[%c0_155, %c0_156] : memref<64x64xf32, #tpu.memory_space<vmem>>, vector<64x64xf32>
    %c0_157 = arith.constant 0 : index
    %c0_158 = arith.constant 0 : index
    %257 = vector.load %arg2[%c0_157, %c0_158] : memref<64x8xf32, #tpu.memory_space<vmem>>, vector<64x8xf32>
    %cst_159 = arith.constant dense<0.000000e+00> : vector<64x8xf32>
    %258 = tpu.matmul %256, %257, %cst_159 {dimension_numbers = #tpu.dot_dimension_numbers<[1], [0], [0], [1], [0, 0, 1, 1], [], []>} : vector<64x64xf32>, vector<64x8xf32>, vector<64x8xf32> -> vector<64x8xf32>
    %c0_160 = arith.constant 0 : index
    %c0_161 = arith.constant 0 : index
    %259 = vector.load %arg3[%c0_160, %c0_161] : memref<64x8xf32, #tpu.memory_space<vmem>>, vector<64x8xf32>
    tpu.vector_store %arg3[%c0_160, %c0_161], %258 {strides = array<i32>} : memref<64x8xf32, #tpu.memory_space<vmem>>, vector<64x8xf32>,
    %cst_162 = arith.constant 0.000000e+00 : f32
    %260 = vector.broadcast %cst_162 : f32 to vector<8x8xf32>
    %c0_163 = arith.constant 0 : index
    %c0_164 = arith.constant 0 : index
    %261 = vector.load %arg7[%c0_163, %c0_164] : memref<8x8xf32, #tpu.memory_space<vmem>>, vector<8x8xf32>
    tpu.vector_store %arg7[%c0_163, %c0_164], %260 {strides = array<i32>} : memref<8x8xf32, #tpu.memory_space<vmem>>, vector<8x8xf32>,
    %cst_165 = arith.constant 0.000000e+00 : f32
    %262 = vector.broadcast %cst_165 : f32 to vector<8x8xf32>
    %c0_166 = arith.constant 0 : index
    %c0_167 = arith.constant 0 : index
    %263 = vector.load %arg8[%c0_166, %c0_167] : memref<8x8xf32, #tpu.memory_space<vmem>>, vector<8x8xf32>
    tpu.vector_store %arg8[%c0_166, %c0_167], %262 {strides = array<i32>} : memref<8x8xf32, #tpu.memory_space<vmem>>, vector<8x8xf32>,
    %c0_i32_168 = arith.constant 0 : i32
    %c8_i32_169 = arith.constant 8 : i32
    %264 = arith.muli %c0_i32_168, %c8_i32_169 : i32
    %265 = tpu.assume_multiple %264, 8 : i32
    %c0_170 = arith.constant 0 : index
    %c0_171 = arith.constant 0 : index
    %266 = vector.load %arg8[%c0_170, %c0_171] : memref<8x8xf32, #tpu.memory_space<vmem>>, vector<8x8xf32>
    %267 = arith.index_cast %265 : i32 to index
    %c0_172 = arith.constant 0 : index
    %268 = vector.load %arg3[%267, %c0_172] : memref<64x8xf32, #tpu.memory_space<vmem>>, vector<8x8xf32>
    %269 = arith.addf %266, %268 : vector<8x8xf32>
    %c0_173 = arith.constant 0 : index
    %c0_174 = arith.constant 0 : index
    %270 = vector.load %arg7[%c0_173, %c0_174] : memref<8x8xf32, #tpu.memory_space<vmem>>, vector<8x8xf32>
    %c0_175 = arith.constant 0 : index
    %c0_176 = arith.constant 0 : index
    %271 = vector.load %arg7[%c0_175, %c0_176] : memref<8x8xf32, #tpu.memory_space<vmem>>, vector<8x8xf32>
    %cst_177 = arith.constant 0.000000e+00 : f32
    %272 = vector.broadcast %cst_177 : f32 to vector<8x8xf32>
    %273 = arith.subf %272, %271 : vector<8x8xf32>
    %274 = arith.addf %273, %269 : vector<8x8xf32>
    %cst_178 = arith.constant 5.000000e-02 : f32
    %275 = vector.broadcast %cst_178 : f32 to vector<8x8xf32>
    %276 = arith.mulf %275, %274 : vector<8x8xf32>
    %277 = arith.addf %270, %276 : vector<8x8xf32>
    %cst_179 = arith.constant 0.899999976 : f32
    %278 = vector.broadcast %cst_179 : f32 to vector<8x8xf32>
    %279 = arith.mulf %278, %269 : vector<8x8xf32>
    %c0_180 = arith.constant 0 : index
    %c0_181 = arith.constant 0 : index
    %280 = vector.load %arg8[%c0_180, %c0_181] : memref<8x8xf32, #tpu.memory_space<vmem>>, vector<8x8xf32>
    tpu.vector_store %arg8[%c0_180, %c0_181], %279 {strides = array<i32>} : memref<8x8xf32, #tpu.memory_space<vmem>>, vector<8x8xf32>,
    %c0_182 = arith.constant 0 : index
    %c0_183 = arith.constant 0 : index
    %281 = vector.load %arg7[%c0_182, %c0_183] : memref<8x8xf32, #tpu.memory_space<vmem>>, vector<8x8xf32>
    tpu.vector_store %arg7[%c0_182, %c0_183], %277 {strides = array<i32>} : memref<8x8xf32, #tpu.memory_space<vmem>>, vector<8x8xf32>,
    %282 = arith.index_cast %265 : i32 to index
    %c0_184 = arith.constant 0 : index
    %283 = vector.load %arg3[%282, %c0_184] : memref<64x8xf32, #tpu.memory_space<vmem>>, vector<8x8xf32>
    tpu.vector_store %arg3[%282, %c0_184], %277 {strides = array<i32>} : memref<64x8xf32, #tpu.memory_space<vmem>>, vector<8x8xf32>,
    %c1_i32_185 = arith.constant 1 : i32
    %c8_i32_186 = arith.constant 8 : i32
    %284 = arith.muli %c1_i32_185, %c8_i32_186 : i32
    %285 = tpu.assume_multiple %284, 8 : i32
    %c0_187 = arith.constant 0 : index
    %c0_188 = arith.constant 0 : index
    %286 = vector.load %arg8[%c0_187, %c0_188] : memref<8x8xf32, #tpu.memory_space<vmem>>, vector<8x8xf32>
    %287 = arith.index_cast %285 : i32 to index
    %c0_189 = arith.constant 0 : index
    %288 = vector.load %arg3[%287, %c0_189] : memref<64x8xf32, #tpu.memory_space<vmem>>, vector<8x8xf32>
    %289 = arith.addf %286, %288 : vector<8x8xf32>
    %c0_190 = arith.constant 0 : index
    %c0_191 = arith.constant 0 : index
    %290 = vector.load %arg7[%c0_190, %c0_191] : memref<8x8xf32, #tpu.memory_space<vmem>>, vector<8x8xf32>
    %c0_192 = arith.constant 0 : index
    %c0_193 = arith.constant 0 : index
    %291 = vector.load %arg7[%c0_192, %c0_193] : memref<8x8xf32, #tpu.memory_space<vmem>>, vector<8x8xf32>
    %cst_194 = arith.constant 0.000000e+00 : f32
    %292 = vector.broadcast %cst_194 : f32 to vector<8x8xf32>
    %293 = arith.subf %292, %291 : vector<8x8xf32>
    %294 = arith.addf %293, %289 : vector<8x8xf32>
    %cst_195 = arith.constant 5.000000e-02 : f32
    %295 = vector.broadcast %cst_195 : f32 to vector<8x8xf32>
    %296 = arith.mulf %295, %294 : vector<8x8xf32>
    %297 = arith.addf %290, %296 : vector<8x8xf32>
    %cst_196 = arith.constant 0.899999976 : f32
    %298 = vector.broadcast %cst_196 : f32 to vector<8x8xf32>
    %299 = arith.mulf %298, %289 : vector<8x8xf32>
    %c0_197 = arith.constant 0 : index
    %c0_198 = arith.constant 0 : index
    %300 = vector.load %arg8[%c0_197, %c0_198] : memref<8x8xf32, #tpu.memory_space<vmem>>, vector<8x8xf32>
    tpu.vector_store %arg8[%c0_197, %c0_198], %299 {strides = array<i32>} : memref<8x8xf32, #tpu.memory_space<vmem>>, vector<8x8xf32>,
    %c0_199 = arith.constant 0 : index
    %c0_200 = arith.constant 0 : index
    %301 = vector.load %arg7[%c0_199, %c0_200] : memref<8x8xf32, #tpu.memory_space<vmem>>, vector<8x8xf32>
    tpu.vector_store %arg7[%c0_199, %c0_200], %297 {strides = array<i32>} : memref<8x8xf32, #tpu.memory_space<vmem>>, vector<8x8xf32>,
    %302 = arith.index_cast %285 : i32 to index
    %c0_201 = arith.constant 0 : index
    %303 = vector.load %arg3[%302, %c0_201] : memref<64x8xf32, #tpu.memory_space<vmem>>, vector<8x8xf32>
    tpu.vector_store %arg3[%302, %c0_201], %297 {strides = array<i32>} : memref<64x8xf32, #tpu.memory_space<vmem>>, vector<8x8xf32>,
    %c2_i32_202 = arith.constant 2 : i32
    %c8_i32_203 = arith.constant 8 : i32
    %304 = arith.muli %c2_i32_202, %c8_i32_203 : i32
    %305 = tpu.assume_multiple %304, 8 : i32
    %c0_204 = arith.constant 0 : index
    %c0_205 = arith.constant 0 : index
    %306 = vector.load %arg8[%c0_204, %c0_205] : memref<8x8xf32, #tpu.memory_space<vmem>>, vector<8x8xf32>
    %307 = arith.index_cast %305 : i32 to index
    %c0_206 = arith.constant 0 : index
    %308 = vector.load %arg3[%307, %c0_206] : memref<64x8xf32, #tpu.memory_space<vmem>>, vector<8x8xf32>
    %309 = arith.addf %306, %308 : vector<8x8xf32>
    %c0_207 = arith.constant 0 : index
    %c0_208 = arith.constant 0 : index
    %310 = vector.load %arg7[%c0_207, %c0_208] : memref<8x8xf32, #tpu.memory_space<vmem>>, vector<8x8xf32>
    %c0_209 = arith.constant 0 : index
    %c0_210 = arith.constant 0 : index
    %311 = vector.load %arg7[%c0_209, %c0_210] : memref<8x8xf32, #tpu.memory_space<vmem>>, vector<8x8xf32>
    %cst_211 = arith.constant 0.000000e+00 : f32
    %312 = vector.broadcast %cst_211 : f32 to vector<8x8xf32>
    %313 = arith.subf %312, %311 : vector<8x8xf32>
    %314 = arith.addf %313, %309 : vector<8x8xf32>
    %cst_212 = arith.constant 5.000000e-02 : f32
    %315 = vector.broadcast %cst_212 : f32 to vector<8x8xf32>
    %316 = arith.mulf %315, %314 : vector<8x8xf32>
    %317 = arith.addf %310, %316 : vector<8x8xf32>
    %cst_213 = arith.constant 0.899999976 : f32
    %318 = vector.broadcast %cst_213 : f32 to vector<8x8xf32>
    %319 = arith.mulf %318, %309 : vector<8x8xf32>
    %c0_214 = arith.constant 0 : index
    %c0_215 = arith.constant 0 : index
    %320 = vector.load %arg8[%c0_214, %c0_215] : memref<8x8xf32, #tpu.memory_space<vmem>>, vector<8x8xf32>
    tpu.vector_store %arg8[%c0_214, %c0_215], %319 {strides = array<i32>} : memref<8x8xf32, #tpu.memory_space<vmem>>, vector<8x8xf32>,
    %c0_216 = arith.constant 0 : index
    %c0_217 = arith.constant 0 : index
    %321 = vector.load %arg7[%c0_216, %c0_217] : memref<8x8xf32, #tpu.memory_space<vmem>>, vector<8x8xf32>
    tpu.vector_store %arg7[%c0_216, %c0_217], %317 {strides = array<i32>} : memref<8x8xf32, #tpu.memory_space<vmem>>, vector<8x8xf32>,
    %322 = arith.index_cast %305 : i32 to index
    %c0_218 = arith.constant 0 : index
    %323 = vector.load %arg3[%322, %c0_218] : memref<64x8xf32, #tpu.memory_space<vmem>>, vector<8x8xf32>
    tpu.vector_store %arg3[%322, %c0_218], %317 {strides = array<i32>} : memref<64x8xf32, #tpu.memory_space<vmem>>, vector<8x8xf32>,
    %c3_i32_219 = arith.constant 3 : i32
    %c8_i32_220 = arith.constant 8 : i32
    %324 = arith.muli %c3_i32_219, %c8_i32_220 : i32
    %325 = tpu.assume_multiple %324, 8 : i32
    %c0_221 = arith.constant 0 : index
    %c0_222 = arith.constant 0 : index
    %326 = vector.load %arg8[%c0_221, %c0_222] : memref<8x8xf32, #tpu.memory_space<vmem>>, vector<8x8xf32>
    %327 = arith.index_cast %325 : i32 to index
    %c0_223 = arith.constant 0 : index
    %328 = vector.load %arg3[%327, %c0_223] : memref<64x8xf32, #tpu.memory_space<vmem>>, vector<8x8xf32>
    %329 = arith.addf %326, %328 : vector<8x8xf32>
    %c0_224 = arith.constant 0 : index
    %c0_225 = arith.constant 0 : index
    %330 = vector.load %arg7[%c0_224, %c0_225] : memref<8x8xf32, #tpu.memory_space<vmem>>, vector<8x8xf32>
    %c0_226 = arith.constant 0 : index
    %c0_227 = arith.constant 0 : index
    %331 = vector.load %arg7[%c0_226, %c0_227] : memref<8x8xf32, #tpu.memory_space<vmem>>, vector<8x8xf32>
    %cst_228 = arith.constant 0.000000e+00 : f32
    %332 = vector.broadcast %cst_228 : f32 to vector<8x8xf32>
    %333 = arith.subf %332, %331 : vector<8x8xf32>
    %334 = arith.addf %333, %329 : vector<8x8xf32>
    %cst_229 = arith.constant 5.000000e-02 : f32
    %335 = vector.broadcast %cst_229 : f32 to vector<8x8xf32>
    %336 = arith.mulf %335, %334 : vector<8x8xf32>
    %337 = arith.addf %330, %336 : vector<8x8xf32>
    %cst_230 = arith.constant 0.899999976 : f32
    %338 = vector.broadcast %cst_230 : f32 to vector<8x8xf32>
    %339 = arith.mulf %338, %329 : vector<8x8xf32>
    %c0_231 = arith.constant 0 : index
    %c0_232 = arith.constant 0 : index
    %340 = vector.load %arg8[%c0_231, %c0_232] : memref<8x8xf32, #tpu.memory_space<vmem>>, vector<8x8xf32>
    tpu.vector_store %arg8[%c0_231, %c0_232], %339 {strides = array<i32>} : memref<8x8xf32, #tpu.memory_space<vmem>>, vector<8x8xf32>,
    %c0_233 = arith.constant 0 : index
    %c0_234 = arith.constant 0 : index
    %341 = vector.load %arg7[%c0_233, %c0_234] : memref<8x8xf32, #tpu.memory_space<vmem>>, vector<8x8xf32>
    tpu.vector_store %arg7[%c0_233, %c0_234], %337 {strides = array<i32>} : memref<8x8xf32, #tpu.memory_space<vmem>>, vector<8x8xf32>,
    %342 = arith.index_cast %325 : i32 to index
    %c0_235 = arith.constant 0 : index
    %343 = vector.load %arg3[%342, %c0_235] : memref<64x8xf32, #tpu.memory_space<vmem>>, vector<8x8xf32>
    tpu.vector_store %arg3[%342, %c0_235], %337 {strides = array<i32>} : memref<64x8xf32, #tpu.memory_space<vmem>>, vector<8x8xf32>,
    %c4_i32_236 = arith.constant 4 : i32
    %c8_i32_237 = arith.constant 8 : i32
    %344 = arith.muli %c4_i32_236, %c8_i32_237 : i32
    %345 = tpu.assume_multiple %344, 8 : i32
    %c0_238 = arith.constant 0 : index
    %c0_239 = arith.constant 0 : index
    %346 = vector.load %arg8[%c0_238, %c0_239] : memref<8x8xf32, #tpu.memory_space<vmem>>, vector<8x8xf32>
    %347 = arith.index_cast %345 : i32 to index
    %c0_240 = arith.constant 0 : index
    %348 = vector.load %arg3[%347, %c0_240] : memref<64x8xf32, #tpu.memory_space<vmem>>, vector<8x8xf32>
    %349 = arith.addf %346, %348 : vector<8x8xf32>
    %c0_241 = arith.constant 0 : index
    %c0_242 = arith.constant 0 : index
    %350 = vector.load %arg7[%c0_241, %c0_242] : memref<8x8xf32, #tpu.memory_space<vmem>>, vector<8x8xf32>
    %c0_243 = arith.constant 0 : index
    %c0_244 = arith.constant 0 : index
    %351 = vector.load %arg7[%c0_243, %c0_244] : memref<8x8xf32, #tpu.memory_space<vmem>>, vector<8x8xf32>
    %cst_245 = arith.constant 0.000000e+00 : f32
    %352 = vector.broadcast %cst_245 : f32 to vector<8x8xf32>
    %353 = arith.subf %352, %351 : vector<8x8xf32>
    %354 = arith.addf %353, %349 : vector<8x8xf32>
    %cst_246 = arith.constant 5.000000e-02 : f32
    %355 = vector.broadcast %cst_246 : f32 to vector<8x8xf32>
    %356 = arith.mulf %355, %354 : vector<8x8xf32>
    %357 = arith.addf %350, %356 : vector<8x8xf32>
    %cst_247 = arith.constant 0.899999976 : f32
    %358 = vector.broadcast %cst_247 : f32 to vector<8x8xf32>
    %359 = arith.mulf %358, %349 : vector<8x8xf32>
    %c0_248 = arith.constant 0 : index
    %c0_249 = arith.constant 0 : index
    %360 = vector.load %arg8[%c0_248, %c0_249] : memref<8x8xf32, #tpu.memory_space<vmem>>, vector<8x8xf32>
    tpu.vector_store %arg8[%c0_248, %c0_249], %359 {strides = array<i32>} : memref<8x8xf32, #tpu.memory_space<vmem>>, vector<8x8xf32>,
    %c0_250 = arith.constant 0 : index
    %c0_251 = arith.constant 0 : index
    %361 = vector.load %arg7[%c0_250, %c0_251] : memref<8x8xf32, #tpu.memory_space<vmem>>, vector<8x8xf32>
    tpu.vector_store %arg7[%c0_250, %c0_251], %357 {strides = array<i32>} : memref<8x8xf32, #tpu.memory_space<vmem>>, vector<8x8xf32>,
    %362 = arith.index_cast %345 : i32 to index
    %c0_252 = arith.constant 0 : index
    %363 = vector.load %arg3[%362, %c0_252] : memref<64x8xf32, #tpu.memory_space<vmem>>, vector<8x8xf32>
    tpu.vector_store %arg3[%362, %c0_252], %357 {strides = array<i32>} : memref<64x8xf32, #tpu.memory_space<vmem>>, vector<8x8xf32>,
    %c5_i32_253 = arith.constant 5 : i32
    %c8_i32_254 = arith.constant 8 : i32
    %364 = arith.muli %c5_i32_253, %c8_i32_254 : i32
    %365 = tpu.assume_multiple %364, 8 : i32
    %c0_255 = arith.constant 0 : index
    %c0_256 = arith.constant 0 : index
    %366 = vector.load %arg8[%c0_255, %c0_256] : memref<8x8xf32, #tpu.memory_space<vmem>>, vector<8x8xf32>
    %367 = arith.index_cast %365 : i32 to index
    %c0_257 = arith.constant 0 : index
    %368 = vector.load %arg3[%367, %c0_257] : memref<64x8xf32, #tpu.memory_space<vmem>>, vector<8x8xf32>
    %369 = arith.addf %366, %368 : vector<8x8xf32>
    %c0_258 = arith.constant 0 : index
    %c0_259 = arith.constant 0 : index
    %370 = vector.load %arg7[%c0_258, %c0_259] : memref<8x8xf32, #tpu.memory_space<vmem>>, vector<8x8xf32>
    %c0_260 = arith.constant 0 : index
    %c0_261 = arith.constant 0 : index
    %371 = vector.load %arg7[%c0_260, %c0_261] : memref<8x8xf32, #tpu.memory_space<vmem>>, vector<8x8xf32>
    %cst_262 = arith.constant 0.000000e+00 : f32
    %372 = vector.broadcast %cst_262 : f32 to vector<8x8xf32>
    %373 = arith.subf %372, %371 : vector<8x8xf32>
    %374 = arith.addf %373, %369 : vector<8x8xf32>
    %cst_263 = arith.constant 5.000000e-02 : f32
    %375 = vector.broadcast %cst_263 : f32 to vector<8x8xf32>
    %376 = arith.mulf %375, %374 : vector<8x8xf32>
    %377 = arith.addf %370, %376 : vector<8x8xf32>
    %cst_264 = arith.constant 0.899999976 : f32
    %378 = vector.broadcast %cst_264 : f32 to vector<8x8xf32>
    %379 = arith.mulf %378, %369 : vector<8x8xf32>
    %c0_265 = arith.constant 0 : index
    %c0_266 = arith.constant 0 : index
    %380 = vector.load %arg8[%c0_265, %c0_266] : memref<8x8xf32, #tpu.memory_space<vmem>>, vector<8x8xf32>
    tpu.vector_store %arg8[%c0_265, %c0_266], %379 {strides = array<i32>} : memref<8x8xf32, #tpu.memory_space<vmem>>, vector<8x8xf32>,
    %c0_267 = arith.constant 0 : index
    %c0_268 = arith.constant 0 : index
    %381 = vector.load %arg7[%c0_267, %c0_268] : memref<8x8xf32, #tpu.memory_space<vmem>>, vector<8x8xf32>
    tpu.vector_store %arg7[%c0_267, %c0_268], %377 {strides = array<i32>} : memref<8x8xf32, #tpu.memory_space<vmem>>, vector<8x8xf32>,
    %382 = arith.index_cast %365 : i32 to index
    %c0_269 = arith.constant 0 : index
    %383 = vector.load %arg3[%382, %c0_269] : memref<64x8xf32, #tpu.memory_space<vmem>>, vector<8x8xf32>
    tpu.vector_store %arg3[%382, %c0_269], %377 {strides = array<i32>} : memref<64x8xf32, #tpu.memory_space<vmem>>, vector<8x8xf32>,
    %c6_i32_270 = arith.constant 6 : i32
    %c8_i32_271 = arith.constant 8 : i32
    %384 = arith.muli %c6_i32_270, %c8_i32_271 : i32
    %385 = tpu.assume_multiple %384, 8 : i32
    %c0_272 = arith.constant 0 : index
    %c0_273 = arith.constant 0 : index
    %386 = vector.load %arg8[%c0_272, %c0_273] : memref<8x8xf32, #tpu.memory_space<vmem>>, vector<8x8xf32>
    %387 = arith.index_cast %385 : i32 to index
    %c0_274 = arith.constant 0 : index
    %388 = vector.load %arg3[%387, %c0_274] : memref<64x8xf32, #tpu.memory_space<vmem>>, vector<8x8xf32>
    %389 = arith.addf %386, %388 : vector<8x8xf32>
    %c0_275 = arith.constant 0 : index
    %c0_276 = arith.constant 0 : index
    %390 = vector.load %arg7[%c0_275, %c0_276] : memref<8x8xf32, #tpu.memory_space<vmem>>, vector<8x8xf32>
    %c0_277 = arith.constant 0 : index
    %c0_278 = arith.constant 0 : index
    %391 = vector.load %arg7[%c0_277, %c0_278] : memref<8x8xf32, #tpu.memory_space<vmem>>, vector<8x8xf32>
    %cst_279 = arith.constant 0.000000e+00 : f32
    %392 = vector.broadcast %cst_279 : f32 to vector<8x8xf32>
    %393 = arith.subf %392, %391 : vector<8x8xf32>
    %394 = arith.addf %393, %389 : vector<8x8xf32>
    %cst_280 = arith.constant 5.000000e-02 : f32
    %395 = vector.broadcast %cst_280 : f32 to vector<8x8xf32>
    %396 = arith.mulf %395, %394 : vector<8x8xf32>
    %397 = arith.addf %390, %396 : vector<8x8xf32>
    %cst_281 = arith.constant 0.899999976 : f32
    %398 = vector.broadcast %cst_281 : f32 to vector<8x8xf32>
    %399 = arith.mulf %398, %389 : vector<8x8xf32>
    %c0_282 = arith.constant 0 : index
    %c0_283 = arith.constant 0 : index
    %400 = vector.load %arg8[%c0_282, %c0_283] : memref<8x8xf32, #tpu.memory_space<vmem>>, vector<8x8xf32>
    tpu.vector_store %arg8[%c0_282, %c0_283], %399 {strides = array<i32>} : memref<8x8xf32, #tpu.memory_space<vmem>>, vector<8x8xf32>,
    %c0_284 = arith.constant 0 : index
    %c0_285 = arith.constant 0 : index
    %401 = vector.load %arg7[%c0_284, %c0_285] : memref<8x8xf32, #tpu.memory_space<vmem>>, vector<8x8xf32>
    tpu.vector_store %arg7[%c0_284, %c0_285], %397 {strides = array<i32>} : memref<8x8xf32, #tpu.memory_space<vmem>>, vector<8x8xf32>,
    %402 = arith.index_cast %385 : i32 to index
    %c0_286 = arith.constant 0 : index
    %403 = vector.load %arg3[%402, %c0_286] : memref<64x8xf32, #tpu.memory_space<vmem>>, vector<8x8xf32>
    tpu.vector_store %arg3[%402, %c0_286], %397 {strides = array<i32>} : memref<64x8xf32, #tpu.memory_space<vmem>>, vector<8x8xf32>,
    %c7_i32_287 = arith.constant 7 : i32
    %c8_i32_288 = arith.constant 8 : i32
    %404 = arith.muli %c7_i32_287, %c8_i32_288 : i32
    %405 = tpu.assume_multiple %404, 8 : i32
    %c0_289 = arith.constant 0 : index
    %c0_290 = arith.constant 0 : index
    %406 = vector.load %arg8[%c0_289, %c0_290] : memref<8x8xf32, #tpu.memory_space<vmem>>, vector<8x8xf32>
    %407 = arith.index_cast %405 : i32 to index
    %c0_291 = arith.constant 0 : index
    %408 = vector.load %arg3[%407, %c0_291] : memref<64x8xf32, #tpu.memory_space<vmem>>, vector<8x8xf32>
    %409 = arith.addf %406, %408 : vector<8x8xf32>
    %c0_292 = arith.constant 0 : index
    %c0_293 = arith.constant 0 : index
    %410 = vector.load %arg7[%c0_292, %c0_293] : memref<8x8xf32, #tpu.memory_space<vmem>>, vector<8x8xf32>
    %c0_294 = arith.constant 0 : index
    %c0_295 = arith.constant 0 : index
    %411 = vector.load %arg7[%c0_294, %c0_295] : memref<8x8xf32, #tpu.memory_space<vmem>>, vector<8x8xf32>
    %cst_296 = arith.constant 0.000000e+00 : f32
    %412 = vector.broadcast %cst_296 : f32 to vector<8x8xf32>
    %413 = arith.subf %412, %411 : vector<8x8xf32>
    %414 = arith.addf %413, %409 : vector<8x8xf32>
    %cst_297 = arith.constant 5.000000e-02 : f32
    %415 = vector.broadcast %cst_297 : f32 to vector<8x8xf32>
    %416 = arith.mulf %415, %414 : vector<8x8xf32>
    %417 = arith.addf %410, %416 : vector<8x8xf32>
    %cst_298 = arith.constant 0.899999976 : f32
    %418 = vector.broadcast %cst_298 : f32 to vector<8x8xf32>
    %419 = arith.mulf %418, %409 : vector<8x8xf32>
    %c0_299 = arith.constant 0 : index
    %c0_300 = arith.constant 0 : index
    %420 = vector.load %arg8[%c0_299, %c0_300] : memref<8x8xf32, #tpu.memory_space<vmem>>, vector<8x8xf32>
    tpu.vector_store %arg8[%c0_299, %c0_300], %419 {strides = array<i32>} : memref<8x8xf32, #tpu.memory_space<vmem>>, vector<8x8xf32>,
    %c0_301 = arith.constant 0 : index
    %c0_302 = arith.constant 0 : index
    %421 = vector.load %arg7[%c0_301, %c0_302] : memref<8x8xf32, #tpu.memory_space<vmem>>, vector<8x8xf32>
    tpu.vector_store %arg7[%c0_301, %c0_302], %417 {strides = array<i32>} : memref<8x8xf32, #tpu.memory_space<vmem>>, vector<8x8xf32>,
    %422 = arith.index_cast %405 : i32 to index
    %c0_303 = arith.constant 0 : index
    %423 = vector.load %arg3[%422, %c0_303] : memref<64x8xf32, #tpu.memory_space<vmem>>, vector<8x8xf32>
    tpu.vector_store %arg3[%422, %c0_303], %417 {strides = array<i32>} : memref<64x8xf32, #tpu.memory_space<vmem>>, vector<8x8xf32>,
    %c8_i32_304 = arith.constant 8 : i32
    return
  }
}

</mosaic_0001>

<llo_original>
// kernel: tpu_custom_call.1
$region0: #{tpu_custom_call.1}
  #allocation0 [shape = 'u32[]', space=smem, size = 0x4, offset = 0x4, fixed_abs, tag = 'smem constant byte address 0x4 - core index']
  #allocation1 [shape = 'u32[72,128]{1,0:T(1,128)}', space=vmem, size = 0x9000, scoped, tag = 'internal scratch']
  #allocation2 [shape = 'f32[64,64]{1,0:T(8,128)}', space=vmem, size = 0x8000, scoped, tag = 'scratch operand']
  #allocation3 [shape = 'f32[8,64]{1,0:T(8,128)}', space=vmem, size = 0x1000, scoped, tag = 'scratch operand']
  #allocation4 [shape = 'f32[8,64]{1,0:T(8,128)}', space=vmem, size = 0x1000, scoped, tag = 'scratch operand']
  #allocation5 [shape = 'f32[8,8]{1,0:T(8,128)}', space=vmem, size = 0x1000, scoped, tag = 'scratch operand']
  #allocation6 [shape = 'f32[8,8]{1,0:T(8,128)}', space=vmem, size = 0x1000, scoped, tag = 'scratch operand']
  %s0 = inlined_call_operand.vmem [shape: f32[64,256], index: 0, kind: input, shape index: {}]
  %s1 = inlined_call_operand.vmem [shape: f32[256,64], index: 1, kind: input, shape index: {}]
  %s2 = inlined_call_operand.vmem [shape: f32[64,8], index: 2, kind: input, shape index: {}]
  %s3 = inlined_call_operand.vmem [shape: f32[64,8], index: 3, kind: output, shape index: {}]
  %s4 = sld [smem:[#allocation0]]
  $region22: #{tpu_custom_call.1} parent=0
    _
  %s6 = ssub.s32 1, %s4
  %s7 = scalar_select 0, %s6, %s4
  // Predicated region
  $region2: #{tpu_custom_call.1} parent=0 // pred_check
    _
  $region3: #{tpu_custom_call.1} parent=0 // pred_check_branch
    %9 = sbr.rel (0) target = $region5
  $region4: #{tpu_custom_call.1} parent=0 // pred_region
    _
  $region5: #{tpu_custom_call.1} parent=0 // pred_fallthru
    _
  // Predicated region
  $region6: #{tpu_custom_call.1} parent=0 // pred_check
    _
  $region7: #{tpu_custom_call.1} parent=0 // pred_check_branch
    %11 = sbr.rel (0) target = $region9
  $region8: #{tpu_custom_call.1} parent=0 // pred_region
    _
  $region9: #{tpu_custom_call.1} parent=0 // pred_fallthru
    _
  // Predicated region
  $region10: #{tpu_custom_call.1} parent=0 // pred_check
    _
  $region11: #{tpu_custom_call.1} parent=0 // pred_check_branch
    %13 = sbr.rel (0) target = $region13
  $region12: #{tpu_custom_call.1} parent=0 // pred_region
    _
  $region13: #{tpu_custom_call.1} parent=0 // pred_fallthru
    _
  %v14 = vld [vmem:[%s0] sm:$0xff]
  %v15 = vld [vmem:[%s0 + $0x8] sm:$0xff]
  %v16 = vld [vmem:[%s0 + $0x10] sm:$0xff]
  %v17 = vld [vmem:[%s0 + $0x18] sm:$0xff]
  %v18 = vld [vmem:[%s0 + $0x20] sm:$0xff]
  %v19 = vld [vmem:[%s0 + $0x28] sm:$0xff]
  %v20 = vld [vmem:[%s0 + $0x30] sm:$0xff]
  %v21 = vld [vmem:[%s0 + $0x38] sm:$0xff]
  %v22 = vld [vmem:[%s0 + $0x40] sm:$0xff]
  %v23 = vld [vmem:[%s0 + $0x48] sm:$0xff]
  %v24 = vld [vmem:[%s0 + $0x50] sm:$0xff]
  %v25 = vld [vmem:[%s0 + $0x58] sm:$0xff]
  %v26 = vld [vmem:[%s0 + $0x60] sm:$0xff]
  %v27 = vld [vmem:[%s0 + $0x68] sm:$0xff]
  %v28 = vld [vmem:[%s0 + $0x70] sm:$0xff]
  %v29 = vld [vmem:[%s0 + $0x78] sm:$0xff]
  %v30 = vld [vmem:[%s1] sm:$0xff]
  %v31 = vld [vmem:[%s1 + $0x8] sm:$0xff]
  %v32 = vld [vmem:[%s1 + $0x10] sm:$0xff]
  %v33 = vld [vmem:[%s1 + $0x18] sm:$0xff]
  %v34 = vld [vmem:[%s1 + $0x20] sm:$0xff]
  %v35 = vld [vmem:[%s1 + $0x28] sm:$0xff]
  %v36 = vld [vmem:[%s1 + $0x30] sm:$0xff]
  %v37 = vld [vmem:[%s1 + $0x38] sm:$0xff]
  %v38 = vld [vmem:[%s1 + $0x40] sm:$0xff]
  %v39 = vld [vmem:[%s1 + $0x48] sm:$0xff]
  %v40 = vld [vmem:[%s1 + $0x50] sm:$0xff]
  %v41 = vld [vmem:[%s1 + $0x58] sm:$0xff]
  %v42 = vld [vmem:[%s1 + $0x60] sm:$0xff]
  %v43 = vld [vmem:[%s1 + $0x68] sm:$0xff]
  %v44 = vld [vmem:[%s1 + $0x70] sm:$0xff]
  %v45 = vld [vmem:[%s1 + $0x78] sm:$0xff]
  %v46 = vld [vmem:[%s1 + $0x80] sm:$0xff]
  %v47 = vld [vmem:[%s1 + $0x88] sm:$0xff]
  %v48 = vld [vmem:[%s1 + $0x90] sm:$0xff]
  %v49 = vld [vmem:[%s1 + $0x98] sm:$0xff]
  %v50 = vld [vmem:[%s1 + $0xa0] sm:$0xff]
  %v51 = vld [vmem:[%s1 + $0xa8] sm:$0xff]
  %v52 = vld [vmem:[%s1 + $0xb0] sm:$0xff]
  %v53 = vld [vmem:[%s1 + $0xb8] sm:$0xff]
  %v54 = vld [vmem:[%s1 + $0xc0] sm:$0xff]
  %v55 = vld [vmem:[%s1 + $0xc8] sm:$0xff]
  %v56 = vld [vmem:[%s1 + $0xd0] sm:$0xff]
  %v57 = vld [vmem:[%s1 + $0xd8] sm:$0xff]
  %v58 = vld [vmem:[%s1 + $0xe0] sm:$0xff]
  %v59 = vld [vmem:[%s1 + $0xe8] sm:$0xff]
  %v60 = vld [vmem:[%s1 + $0xf0] sm:$0xff]
  %v61 = vld [vmem:[%s1 + $0xf8] sm:$0xff]
  %62 = vmatpush.msra.mxu0 %v45
  %63 = vmatpush.msra.mxu0 %v44
  %64 = vmatpush.msra.mxu0 %v43
  %65 = vmatpush.msra.mxu0 %v42
  %66 = vmatpush.msra.mxu0 %v41
  %67 = vmatpush.msra.mxu0 %v40
  %68 = vmatpush.msra.mxu0 %v39
  %69 = vmatpush.msra.mxu0 %v38
  %70 = vmatpush.msra.mxu0 %v37
  %71 = vmatpush.msra.mxu0 %v36
  %72 = vmatpush.msra.mxu0 %v35
  %73 = vmatpush.msra.mxu0 %v34
  %74 = vmatpush.msra.mxu0 %v33
  %75 = vmatpush.msra.mxu0 %v32
  %76 = vmatpush.msra.mxu0 %v31
  %77 = vmatpush.msra.mxu0 %v30
  %78 = vmatmul.f32.gmra.mxu0 %v14
  %v79 = vpop.f32.mrf.mxu0
  %v80 = vadd.f32 0.0, %v79
  %81 = vmatmul.f32.gmra.mxu0 %v16
  %v82 = vpop.f32.mrf.mxu0
  %v83 = vadd.f32 0.0, %v82
  %84 = vmatmul.f32.gmra.mxu0 %v18
  %v85 = vpop.f32.mrf.mxu0
  %v86 = vadd.f32 0.0, %v85
  %87 = vmatmul.f32.gmra.mxu0 %v20
  %v88 = vpop.f32.mrf.mxu0
  %v89 = vadd.f32 0.0, %v88
  %90 = vmatmul.f32.gmra.mxu0 %v22
  %v91 = vpop.f32.mrf.mxu0
  %v92 = vadd.f32 0.0, %v91
  %93 = vmatmul.f32.gmra.mxu0 %v24
  %v94 = vpop.f32.mrf.mxu0
  %v95 = vadd.f32 0.0, %v94
  %96 = vmatmul.f32.gmra.mxu0 %v26
  %v97 = vpop.f32.mrf.mxu0
  %v98 = vadd.f32 0.0, %v97
  %99 = vmatmul.f32.gmra.mxu0 %v28
  %v100 = vpop.f32.mrf.mxu0
  %v101 = vadd.f32 0.0, %v100
  %102 = vdwg.mxu0
  %103 = vmatpush.msra.mxu0 %v61
  %104 = vmatpush.msra.mxu0 %v60
  %105 = vmatpush.msra.mxu0 %v59
  %106 = vmatpush.msra.mxu0 %v58
  %107 = vmatpush.msra.mxu0 %v57
  %108 = vmatpush.msra.mxu0 %v56
  %109 = vmatpush.msra.mxu0 %v55
  %110 = vmatpush.msra.mxu0 %v54
  %111 = vmatpush.msra.mxu0 %v53
  %112 = vmatpush.msra.mxu0 %v52
  %113 = vmatpush.msra.mxu0 %v51
  %114 = vmatpush.msra.mxu0 %v50
  %115 = vmatpush.msra.mxu0 %v49
  %116 = vmatpush.msra.mxu0 %v48
  %117 = vmatpush.msra.mxu0 %v47
  %118 = vmatpush.msra.mxu0 %v46
  %119 = vmatmul.f32.gmra.mxu0 %v15
  %v120 = vpop.f32.mrf.mxu0
  %v121 = vadd.f32 %v80, %v120
  %122 = vmatmul.f32.gmra.mxu0 %v17
  %v123 = vpop.f32.mrf.mxu0
  %v124 = vadd.f32 %v83, %v123
  %125 = vmatmul.f32.gmra.mxu0 %v19
  %v126 = vpop.f32.mrf.mxu0
  %v127 = vadd.f32 %v86, %v126
  %128 = vmatmul.f32.gmra.mxu0 %v21
  %v129 = vpop.f32.mrf.mxu0
  %v130 = vadd.f32 %v89, %v129
  %131 = vmatmul.f32.gmra.mxu0 %v23
  %v132 = vpop.f32.mrf.mxu0
  %v133 = vadd.f32 %v92, %v132
  %134 = vmatmul.f32.gmra.mxu0 %v25
  %v135 = vpop.f32.mrf.mxu0
  %v136 = vadd.f32 %v95, %v135
  %137 = vmatmul.f32.gmra.mxu0 %v27
  %v138 = vpop.f32.mrf.mxu0
  %v139 = vadd.f32 %v98, %v138
  %140 = vmatmul.f32.gmra.mxu0 %v29
  %v141 = vpop.f32.mrf.mxu0
  %v142 = vadd.f32 %v101, %v141
  %143 = vdwg.mxu0
  %vm144 = vcmask 523264
  %145 = vst.msk [vmem:[#allocation2] sm:$0xff] %vm144, %v121
  %146 = vst.msk [vmem:[#allocation2 + $0x8] sm:$0xff] %vm144, %v124
  %147 = vst.msk [vmem:[#allocation2 + $0x10] sm:$0xff] %vm144, %v127
  %148 = vst.msk [vmem:[#allocation2 + $0x18] sm:$0xff] %vm144, %v130
  %149 = vst.msk [vmem:[#allocation2 + $0x20] sm:$0xff] %vm144, %v133
  %150 = vst.msk [vmem:[#allocation2 + $0x28] sm:$0xff] %vm144, %v136
  %151 = vst.msk [vmem:[#allocation2 + $0x30] sm:$0xff] %vm144, %v139
  %152 = vst.msk [vmem:[#allocation2 + $0x38] sm:$0xff] %vm144, %v142
  %153 = vst.msk [vmem:[#allocation3] sm:$0xff] %vm144, 0.0
  %154 = vst.msk [vmem:[#allocation4] sm:$0xff] %vm144, 0.0
  %v155 = vld [vmem:[#allocation2] sm:$0xff]
  %v156 = vld [vmem:[#allocation3] sm:$0xff]
  %v157 = vld [vmem:[#allocation4] sm:$0xff]
  %v158 = vsub.f32 0.0, %v156
  %v159 = vadd.f32 %v158, %v157
  %v160 = vmul.f32 %v159, 0.05
  %v161 = vadd.f32 %v156, %v160
  %v162 = vmul.f32 %v157, 0.9
  %v163 = vsub.f32 %v161, 1.0
  %vm164 = vcmp.gt.f32.partialorder %v163, 0.0
  %v165 = vsel %vm164, 1, 0
  %v166 = vcvt.s32.f32 %v165
  %167 = vst.msk [vmem:[#allocation2] sm:$0xff] %vm144, %v166
  %v168 = vsub.f32 1.0, %v166
  %v169 = vmul.f32 %v168, %v161
  %v170 = vmul.f32 %v166, 0.0
  %v171 = vadd.f32 %v169, %v170
  %172 = vst.msk [vmem:[#allocation3] sm:$0xff] %vm144, %v171
  %v173 = vadd.f32 %v162, %v155
  %174 = vst.msk [vmem:[#allocation4] sm:$0xff] %vm144, %v173
  %s175 = scalar_lea.vmem [#allocation2], 8
  %v176 = vld [vmem:[%s175] sm:$0xff]
  %v177 = vld [vmem:[#allocation3] sm:$0xff]
  %v178 = vld [vmem:[#allocation4] sm:$0xff]
  %v179 = vsub.f32 0.0, %v177
  %v180 = vadd.f32 %v179, %v178
  %v181 = vmul.f32 %v180, 0.05
  %v182 = vadd.f32 %v177, %v181
  %v183 = vmul.f32 %v178, 0.9
  %v184 = vsub.f32 %v182, 1.0
  %vm185 = vcmp.gt.f32.partialorder %v184, 0.0
  %v186 = vsel %vm185, 1, 0
  %v187 = vcvt.s32.f32 %v186
  %188 = vst.msk [vmem:[%s175] sm:$0xff] %vm144, %v187
  %v189 = vsub.f32 1.0, %v187
  %v190 = vmul.f32 %v189, %v182
  %v191 = vmul.f32 %v187, 0.0
  %v192 = vadd.f32 %v190, %v191
  %193 = vst.msk [vmem:[#allocation3] sm:$0xff] %vm144, %v192
  %v194 = vadd.f32 %v183, %v176
  %195 = vst.msk [vmem:[#allocation4] sm:$0xff] %vm144, %v194
  %s196 = scalar_lea.vmem [#allocation2], 16
  %v197 = vld [vmem:[%s196] sm:$0xff]
  %v198 = vld [vmem:[#allocation3] sm:$0xff]
  %v199 = vld [vmem:[#allocation4] sm:$0xff]
  %v200 = vsub.f32 0.0, %v198
  %v201 = vadd.f32 %v200, %v199
  %v202 = vmul.f32 %v201, 0.05
  %v203 = vadd.f32 %v198, %v202
  %v204 = vmul.f32 %v199, 0.9
  %v205 = vsub.f32 %v203, 1.0
  %vm206 = vcmp.gt.f32.partialorder %v205, 0.0
  %v207 = vsel %vm206, 1, 0
  %v208 = vcvt.s32.f32 %v207
  %209 = vst.msk [vmem:[%s196] sm:$0xff] %vm144, %v208
  %v210 = vsub.f32 1.0, %v208
  %v211 = vmul.f32 %v210, %v203
  %v212 = vmul.f32 %v208, 0.0
  %v213 = vadd.f32 %v211, %v212
  %214 = vst.msk [vmem:[#allocation3] sm:$0xff] %vm144, %v213
  %v215 = vadd.f32 %v204, %v197
  %216 = vst.msk [vmem:[#allocation4] sm:$0xff] %vm144, %v215
  %s217 = scalar_lea.vmem [#allocation2], 24
  %v218 = vld [vmem:[%s217] sm:$0xff]
  %v219 = vld [vmem:[#allocation3] sm:$0xff]
  %v220 = vld [vmem:[#allocation4] sm:$0xff]
  %v221 = vsub.f32 0.0, %v219
  %v222 = vadd.f32 %v221, %v220
  %v223 = vmul.f32 %v222, 0.05
  %v224 = vadd.f32 %v219, %v223
  %v225 = vmul.f32 %v220, 0.9
  %v226 = vsub.f32 %v224, 1.0
  %vm227 = vcmp.gt.f32.partialorder %v226, 0.0
  %v228 = vsel %vm227, 1, 0
  %v229 = vcvt.s32.f32 %v228
  %230 = vst.msk [vmem:[%s217] sm:$0xff] %vm144, %v229
  %v231 = vsub.f32 1.0, %v229
  %v232 = vmul.f32 %v231, %v224
  %v233 = vmul.f32 %v229, 0.0
  %v234 = vadd.f32 %v232, %v233
  %235 = vst.msk [vmem:[#allocation3] sm:$0xff] %vm144, %v234
  %v236 = vadd.f32 %v225, %v218
  %237 = vst.msk [vmem:[#allocation4] sm:$0xff] %vm144, %v236
  %s238 = scalar_lea.vmem [#allocation2], 32
  %v239 = vld [vmem:[%s238] sm:$0xff]
  %v240 = vld [vmem:[#allocation3] sm:$0xff]
  %v241 = vld [vmem:[#allocation4] sm:$0xff]
  %v242 = vsub.f32 0.0, %v240
  %v243 = vadd.f32 %v242, %v241
  %v244 = vmul.f32 %v243, 0.05
  %v245 = vadd.f32 %v240, %v244
  %v246 = vmul.f32 %v241, 0.9
  %v247 = vsub.f32 %v245, 1.0
  %vm248 = vcmp.gt.f32.partialorder %v247, 0.0
  %v249 = vsel %vm248, 1, 0
  %v250 = vcvt.s32.f32 %v249
  %251 = vst.msk [vmem:[%s238] sm:$0xff] %vm144, %v250
  %v252 = vsub.f32 1.0, %v250
  %v253 = vmul.f32 %v252, %v245
  %v254 = vmul.f32 %v250, 0.0
  %v255 = vadd.f32 %v253, %v254
  %256 = vst.msk [vmem:[#allocation3] sm:$0xff] %vm144, %v255
  %v257 = vadd.f32 %v246, %v239
  %258 = vst.msk [vmem:[#allocation4] sm:$0xff] %vm144, %v257
  %s259 = scalar_lea.vmem [#allocation2], 40
  %v260 = vld [vmem:[%s259] sm:$0xff]
  %v261 = vld [vmem:[#allocation3] sm:$0xff]
  %v262 = vld [vmem:[#allocation4] sm:$0xff]
  %v263 = vsub.f32 0.0, %v261
  %v264 = vadd.f32 %v263, %v262
  %v265 = vmul.f32 %v264, 0.05
  %v266 = vadd.f32 %v261, %v265
  %v267 = vmul.f32 %v262, 0.9
  %v268 = vsub.f32 %v266, 1.0
  %vm269 = vcmp.gt.f32.partialorder %v268, 0.0
  %v270 = vsel %vm269, 1, 0
  %v271 = vcvt.s32.f32 %v270
  %272 = vst.msk [vmem:[%s259] sm:$0xff] %vm144, %v271
  %v273 = vsub.f32 1.0, %v271
  %v274 = vmul.f32 %v273, %v266
  %v275 = vmul.f32 %v271, 0.0
  %v276 = vadd.f32 %v274, %v275
  %277 = vst.msk [vmem:[#allocation3] sm:$0xff] %vm144, %v276
  %v278 = vadd.f32 %v267, %v260
  %279 = vst.msk [vmem:[#allocation4] sm:$0xff] %vm144, %v278
  %s280 = scalar_lea.vmem [#allocation2], 48
  %v281 = vld [vmem:[%s280] sm:$0xff]
  %v282 = vld [vmem:[#allocation3] sm:$0xff]
  %v283 = vld [vmem:[#allocation4] sm:$0xff]
  %v284 = vsub.f32 0.0, %v282
  %v285 = vadd.f32 %v284, %v283
  %v286 = vmul.f32 %v285, 0.05
  %v287 = vadd.f32 %v282, %v286
  %v288 = vmul.f32 %v283, 0.9
  %v289 = vsub.f32 %v287, 1.0
  %vm290 = vcmp.gt.f32.partialorder %v289, 0.0
  %v291 = vsel %vm290, 1, 0
  %v292 = vcvt.s32.f32 %v291
  %293 = vst.msk [vmem:[%s280] sm:$0xff] %vm144, %v292
  %v294 = vsub.f32 1.0, %v292
  %v295 = vmul.f32 %v294, %v287
  %v296 = vmul.f32 %v292, 0.0
  %v297 = vadd.f32 %v295, %v296
  %298 = vst.msk [vmem:[#allocation3] sm:$0xff] %vm144, %v297
  %v299 = vadd.f32 %v288, %v281
  %300 = vst.msk [vmem:[#allocation4] sm:$0xff] %vm144, %v299
  %s301 = scalar_lea.vmem [#allocation2], 56
  %v302 = vld [vmem:[%s301] sm:$0xff]
  %v303 = vld [vmem:[#allocation3] sm:$0xff]
  %v304 = vld [vmem:[#allocation4] sm:$0xff]
  %v305 = vsub.f32 0.0, %v303
  %v306 = vadd.f32 %v305, %v304
  %v307 = vmul.f32 %v306, 0.05
  %v308 = vadd.f32 %v303, %v307
  %v309 = vmul.f32 %v304, 0.9
  %v310 = vsub.f32 %v308, 1.0
  %vm311 = vcmp.gt.f32.partialorder %v310, 0.0
  %v312 = vsel %vm311, 1, 0
  %v313 = vcvt.s32.f32 %v312
  %314 = vst.msk [vmem:[%s301] sm:$0xff] %vm144, %v313
  %v315 = vsub.f32 1.0, %v313
  %v316 = vmul.f32 %v315, %v308
  %v317 = vmul.f32 %v313, 0.0
  %v318 = vadd.f32 %v316, %v317
  %319 = vst.msk [vmem:[#allocation3] sm:$0xff] %vm144, %v318
  %v320 = vadd.f32 %v309, %v302
  %321 = vst.msk [vmem:[#allocation4] sm:$0xff] %vm144, %v320
  %v322 = vld [vmem:[#allocation2] sm:$0xff]
  %v323 = vld [vmem:[#allocation2 + $0x8] sm:$0xff]
  %v324 = vld [vmem:[#allocation2 + $0x10] sm:$0xff]
  %v325 = vld [vmem:[#allocation2 + $0x18] sm:$0xff]
  %v326 = vld [vmem:[#allocation2 + $0x20] sm:$0xff]
  %v327 = vld [vmem:[#allocation2 + $0x28] sm:$0xff]
  %v328 = vld [vmem:[#allocation2 + $0x30] sm:$0xff]
  %v329 = vld [vmem:[#allocation2 + $0x38] sm:$0xff]
  %v330 = vld [vmem:[%s2] sm:$0xff]
  %v331 = vld [vmem:[%s2 + $0x8] sm:$0xff]
  %v332 = vld [vmem:[%s2 + $0x10] sm:$0xff]
  %v333 = vld [vmem:[%s2 + $0x18] sm:$0xff]
  %v334 = vld [vmem:[%s2 + $0x20] sm:$0xff]
  %v335 = vld [vmem:[%s2 + $0x28] sm:$0xff]
  %v336 = vld [vmem:[%s2 + $0x30] sm:$0xff]
  %v337 = vld [vmem:[%s2 + $0x38] sm:$0xff]
  %v339 = vsel %vm144, %v322, 0
  %v342 = vsel %vm144, %v323, 0
  %v345 = vsel %vm144, %v324, 0
  %v348 = vsel %vm144, %v325, 0
  %v351 = vsel %vm144, %v326, 0
  %v354 = vsel %vm144, %v327, 0
  %v357 = vsel %vm144, %v328, 0
  %v360 = vsel %vm144, %v329, 0
  %362 = vmatpush.msra.mxu0 0.0
  %363 = vmatpush.msra.mxu0 0.0
  %364 = vmatpush.msra.mxu0 0.0
  %365 = vmatpush.msra.mxu0 0.0
  %366 = vmatpush.msra.mxu0 0.0
  %367 = vmatpush.msra.mxu0 0.0
  %368 = vmatpush.msra.mxu0 0.0
  %369 = vmatpush.msra.mxu0 0.0
  %370 = vmatpush.msra.mxu0 %v337
  %371 = vmatpush.msra.mxu0 %v336
  %372 = vmatpush.msra.mxu0 %v335
  %373 = vmatpush.msra.mxu0 %v334
  %374 = vmatpush.msra.mxu0 %v333
  %375 = vmatpush.msra.mxu0 %v332
  %376 = vmatpush.msra.mxu0 %v331
  %377 = vmatpush.msra.mxu0 %v330
  %378 = vmatmul.f32.gmra.mxu0 %v339
  %v379 = vpop.f32.mrf.mxu0
  %v380 = vadd.f32 0.0, %v379
  %381 = vmatmul.f32.gmra.mxu0 %v342
  %v382 = vpop.f32.mrf.mxu0
  %v383 = vadd.f32 0.0, %v382
  %384 = vmatmul.f32.gmra.mxu0 %v345
  %v385 = vpop.f32.mrf.mxu0
  %v386 = vadd.f32 0.0, %v385
  %387 = vmatmul.f32.gmra.mxu0 %v348
  %v388 = vpop.f32.mrf.mxu0
  %v389 = vadd.f32 0.0, %v388
  %390 = vmatmul.f32.gmra.mxu0 %v351
  %v391 = vpop.f32.mrf.mxu0
  %v392 = vadd.f32 0.0, %v391
  %393 = vmatmul.f32.gmra.mxu0 %v354
  %v394 = vpop.f32.mrf.mxu0
  %v395 = vadd.f32 0.0, %v394
  %396 = vmatmul.f32.gmra.mxu0 %v357
  %v397 = vpop.f32.mrf.mxu0
  %v398 = vadd.f32 0.0, %v397
  %399 = vmatmul.f32.gmra.mxu0 %v360
  %v400 = vpop.f32.mrf.mxu0
  %v401 = vadd.f32 0.0, %v400
  %402 = vdwg.mxu0
  %vm403 = vcmask 64512
  %404 = vst.msk [vmem:[%s3] sm:$0xff] %vm403, %v380
  %405 = vst.msk [vmem:[%s3 + $0x8] sm:$0xff] %vm403, %v383
  %406 = vst.msk [vmem:[%s3 + $0x10] sm:$0xff] %vm403, %v386
  %407 = vst.msk [vmem:[%s3 + $0x18] sm:$0xff] %vm403, %v389
  %408 = vst.msk [vmem:[%s3 + $0x20] sm:$0xff] %vm403, %v392
  %409 = vst.msk [vmem:[%s3 + $0x28] sm:$0xff] %vm403, %v395
  %410 = vst.msk [vmem:[%s3 + $0x30] sm:$0xff] %vm403, %v398
  %411 = vst.msk [vmem:[%s3 + $0x38] sm:$0xff] %vm403, %v401
  %412 = vst.msk [vmem:[#allocation5] sm:$0xff] %vm403, 0.0
  %413 = vst.msk [vmem:[#allocation6] sm:$0xff] %vm403, 0.0
  %v414 = vld [vmem:[#allocation6] sm:$0xff]
  %v415 = vld [vmem:[%s3] sm:$0xff]
  %v416 = vadd.f32 %v414, %v415
  %v417 = vld [vmem:[#allocation5] sm:$0xff]
  %v418 = vsub.f32 0.0, %v417
  %v419 = vadd.f32 %v418, %v416
  %v420 = vmul.f32 %v419, 0.05
  %v421 = vadd.f32 %v417, %v420
  %v422 = vmul.f32 %v416, 0.9
  %423 = vst.msk [vmem:[#allocation6] sm:$0xff] %vm403, %v422
  %424 = vst.msk [vmem:[#allocation5] sm:$0xff] %vm403, %v421
  %425 = vst.msk [vmem:[%s3] sm:$0xff] %vm403, %v421
  %v426 = vld [vmem:[#allocation6] sm:$0xff]
  %s427 = scalar_lea.vmem %s3, 8
  %v428 = vld [vmem:[%s427] sm:$0xff]
  %v429 = vadd.f32 %v426, %v428
  %v430 = vld [vmem:[#allocation5] sm:$0xff]
  %v431 = vsub.f32 0.0, %v430
  %v432 = vadd.f32 %v431, %v429
  %v433 = vmul.f32 %v432, 0.05
  %v434 = vadd.f32 %v430, %v433
  %v435 = vmul.f32 %v429, 0.9
  %436 = vst.msk [vmem:[#allocation6] sm:$0xff] %vm403, %v435
  %437 = vst.msk [vmem:[#allocation5] sm:$0xff] %vm403, %v434
  %438 = vst.msk [vmem:[%s427] sm:$0xff] %vm403, %v434
  %v439 = vld [vmem:[#allocation6] sm:$0xff]
  %s440 = scalar_lea.vmem %s3, 16
  %v441 = vld [vmem:[%s440] sm:$0xff]
  %v442 = vadd.f32 %v439, %v441
  %v443 = vld [vmem:[#allocation5] sm:$0xff]
  %v444 = vsub.f32 0.0, %v443
  %v445 = vadd.f32 %v444, %v442
  %v446 = vmul.f32 %v445, 0.05
  %v447 = vadd.f32 %v443, %v446
  %v448 = vmul.f32 %v442, 0.9
  %449 = vst.msk [vmem:[#allocation6] sm:$0xff] %vm403, %v448
  %450 = vst.msk [vmem:[#allocation5] sm:$0xff] %vm403, %v447
  %451 = vst.msk [vmem:[%s440] sm:$0xff] %vm403, %v447
  %v452 = vld [vmem:[#allocation6] sm:$0xff]
  %s453 = scalar_lea.vmem %s3, 24
  %v454 = vld [vmem:[%s453] sm:$0xff]
  %v455 = vadd.f32 %v452, %v454
  %v456 = vld [vmem:[#allocation5] sm:$0xff]
  %v457 = vsub.f32 0.0, %v456
  %v458 = vadd.f32 %v457, %v455
  %v459 = vmul.f32 %v458, 0.05
  %v460 = vadd.f32 %v456, %v459
  %v461 = vmul.f32 %v455, 0.9
  %462 = vst.msk [vmem:[#allocation6] sm:$0xff] %vm403, %v461
  %463 = vst.msk [vmem:[#allocation5] sm:$0xff] %vm403, %v460
  %464 = vst.msk [vmem:[%s453] sm:$0xff] %vm403, %v460
  %v465 = vld [vmem:[#allocation6] sm:$0xff]
  %s466 = scalar_lea.vmem %s3, 32
  %v467 = vld [vmem:[%s466] sm:$0xff]
  %v468 = vadd.f32 %v465, %v467
  %v469 = vld [vmem:[#allocation5] sm:$0xff]
  %v470 = vsub.f32 0.0, %v469
  %v471 = vadd.f32 %v470, %v468
  %v472 = vmul.f32 %v471, 0.05
  %v473 = vadd.f32 %v469, %v472
  %v474 = vmul.f32 %v468, 0.9
  %475 = vst.msk [vmem:[#allocation6] sm:$0xff] %vm403, %v474
  %476 = vst.msk [vmem:[#allocation5] sm:$0xff] %vm403, %v473
  %477 = vst.msk [vmem:[%s466] sm:$0xff] %vm403, %v473
  %v478 = vld [vmem:[#allocation6] sm:$0xff]
  %s479 = scalar_lea.vmem %s3, 40
  %v480 = vld [vmem:[%s479] sm:$0xff]
  %v481 = vadd.f32 %v478, %v480
  %v482 = vld [vmem:[#allocation5] sm:$0xff]
  %v483 = vsub.f32 0.0, %v482
  %v484 = vadd.f32 %v483, %v481
  %v485 = vmul.f32 %v484, 0.05
  %v486 = vadd.f32 %v482, %v485
  %v487 = vmul.f32 %v481, 0.9
  %488 = vst.msk [vmem:[#allocation6] sm:$0xff] %vm403, %v487
  %489 = vst.msk [vmem:[#allocation5] sm:$0xff] %vm403, %v486
  %490 = vst.msk [vmem:[%s479] sm:$0xff] %vm403, %v486
  %v491 = vld [vmem:[#allocation6] sm:$0xff]
  %s492 = scalar_lea.vmem %s3, 48
  %v493 = vld [vmem:[%s492] sm:$0xff]
  %v494 = vadd.f32 %v491, %v493
  %v495 = vld [vmem:[#allocation5] sm:$0xff]
  %v496 = vsub.f32 0.0, %v495
  %v497 = vadd.f32 %v496, %v494
  %v498 = vmul.f32 %v497, 0.05
  %v499 = vadd.f32 %v495, %v498
  %v500 = vmul.f32 %v494, 0.9
  %501 = vst.msk [vmem:[#allocation6] sm:$0xff] %vm403, %v500
  %502 = vst.msk [vmem:[#allocation5] sm:$0xff] %vm403, %v499
  %503 = vst.msk [vmem:[%s492] sm:$0xff] %vm403, %v499
  %v504 = vld [vmem:[#allocation6] sm:$0xff]
  %s505 = scalar_lea.vmem %s3, 56
  %v506 = vld [vmem:[%s505] sm:$0xff]
  %v507 = vadd.f32 %v504, %v506
  %v508 = vld [vmem:[#allocation5] sm:$0xff]
  %v509 = vsub.f32 0.0, %v508
  %v510 = vadd.f32 %v509, %v507
  %v511 = vmul.f32 %v510, 0.05
  %v512 = vadd.f32 %v508, %v511
  %v513 = vmul.f32 %v507, 0.9
  %514 = vst.msk [vmem:[#allocation6] sm:$0xff] %vm403, %v513
  %515 = vst.msk [vmem:[#allocation5] sm:$0xff] %vm403, %v512
  %516 = vst.msk [vmem:[%s505] sm:$0xff] %vm403, %v512
  // Predicated region
  $region14: #{tpu_custom_call.1} parent=0 // pred_check
    _
  $region15: #{tpu_custom_call.1} parent=0 // pred_check_branch
    %518 = sbr.rel (0) target = $region17
  $region16: #{tpu_custom_call.1} parent=0 // pred_region
    _
  $region17: #{tpu_custom_call.1} parent=0 // pred_fallthru
    _
  // Predicated region
  $region18: #{tpu_custom_call.1} parent=0 // pred_check
    _
  $region19: #{tpu_custom_call.1} parent=0 // pred_check_branch
    %520 = sbr.rel (0) target = $region21
  $region20: #{tpu_custom_call.1} parent=0 // pred_region
    _
  $region21: #{tpu_custom_call.1} parent=0 // pred_fallthru
    _

</llo_original>
